<compile_context>
chip_gen: v7x
topology: tpu7x:2x2x1
jax: 0.10.0
libtpu: 0.0.40
codegen_flags: <defaults>
</compile_context>

<pallas_src>
import math

import jax
import jax.numpy as jnp
from jax.experimental import pallas as pl
from jax.experimental.pallas import tpu as pltpu

D_MODEL = 32
N_HEADS = 4
D_HEAD = D_MODEL // N_HEADS
D_FF = 64
EPS = 1e-5  # torch.nn.LayerNorm default eps


# ------------------------- fused encoder-layer kernel ------------------------
def _encoder_layer_kernel(x_ref, mask_ref,
                          wqkv_ref, bqkv_ref, wo_ref, bo_ref,
                          w1_ref, b1_ref, w2_ref, b2_ref,
                          ln1g_ref, ln1b_ref, ln2g_ref, ln2b_ref,
                          o_ref):
    """One grid step = one batch element.  Everything stays resident in VMEM."""
    x = x_ref[0].astype(jnp.float32)          # (S, D)
    mask = mask_ref[0]                        # (1, S)  float32; 0 => masked out

    def _layernorm(t, g_ref, b_ref):
        mu = jnp.mean(t, axis=-1, keepdims=True)
        var = jnp.mean((t - mu) ** 2, axis=-1, keepdims=True)   # biased, like torch
        return (t - mu) * jax.lax.rsqrt(var + EPS) * g_ref[...] + b_ref[...]

    # ---- sublayer 0: x + self_attn(LN(x), LN(x), LN(x), mask)  (dropout = id)
    h = _layernorm(x, ln1g_ref, ln1b_ref)                                 # (S, D)
    qkv = jnp.dot(h, wqkv_ref[...],
                  preferred_element_type=jnp.float32) + bqkv_ref[...]     # (S, 3D)
    wo = wo_ref[...].astype(jnp.float32)                                  # (D, D)

    attn = None
    for hh in range(N_HEADS):                 # static unroll; heads are lane slices
        lo = hh * D_HEAD
        q = qkv[:, lo:lo + D_HEAD]                                   # pre-scaled
        k = qkv[:, D_MODEL + lo:D_MODEL + lo + D_HEAD]
        v = qkv[:, 2 * D_MODEL + lo:2 * D_MODEL + lo + D_HEAD]
        s = jnp.dot(q, k.T, preferred_element_type=jnp.float32)     # (S, S)
        s = jnp.where(mask == 0.0, -1e9, s)                         # key mask
        s = s - jnp.max(s, axis=-1, keepdims=True)
        p = jnp.exp(s)
        p = p * pl.reciprocal(jnp.sum(p, axis=-1, keepdims=True), approx=True)
        ctx = jnp.dot(p, v, preferred_element_type=jnp.float32)     # (S, dh)
        part = jnp.dot(ctx, wo[lo:lo + D_HEAD, :],
                       preferred_element_type=jnp.float32)          # (S, D)
        attn = part if attn is None else attn + part
    x = x + attn + bo_ref[...]

    # ---- sublayer 1: x + feed_forward(LN(x))  (dropout = identity) ----------
    h = _layernorm(x, ln2g_ref, ln2b_ref)
    f = jnp.dot(h, w1_ref[...], preferred_element_type=jnp.float32) + b1_ref[...]
    f = jnp.maximum(f, 0.0)
    f = jnp.dot(f, w2_ref[...], preferred_element_type=jnp.float32) + b2_ref[...]
    o_ref[0] = (x + f).astype(o_ref.dtype)


# ------------------------------- host wrapper --------------------------------
def encoder_layer_forward(x, packed, mask=None):
    """Fused pre-norm EncoderLayer forward.  x: (B, S, D); mask: None or (B,1,S)."""
    B, S, D = x.shape
    assert D == D_MODEL
    if mask is None:
        mask = jnp.ones((B, 1, S), jnp.float32)
    else:
        mask = jnp.asarray(mask, jnp.float32).reshape(B, 1, S)

    def w_spec(shape):
        return pl.BlockSpec(shape, lambda b: (0, 0))

    return pl.pallas_call(
        _encoder_layer_kernel,
        out_shape=jax.ShapeDtypeStruct((B, S, D), x.dtype),
        grid=(B,),
        in_specs=[
            pl.BlockSpec((1, S, D), lambda b: (b, 0, 0)),   # x
            pl.BlockSpec((1, 1, S), lambda b: (b, 0, 0)),   # mask
            w_spec((D, 3 * D)),                             # wqkv (Q scaled)
            w_spec((1, 3 * D)),                             # bqkv
            w_spec((D, D)),                                 # wo
            w_spec((1, D)),                                 # bo
            w_spec((D, D_FF)),                              # w1
            w_spec((1, D_FF)),                              # b1
            w_spec((D_FF, D)),                              # w2
            w_spec((1, D)),                                 # b2
            w_spec((1, D)),                                 # ln1_g
            w_spec((1, D)),                                 # ln1_b
            w_spec((1, D)),                                 # ln2_g
            w_spec((1, D)),                                 # ln2_b
        ],
        out_specs=pl.BlockSpec((1, S, D), lambda b: (b, 0, 0)),
        compiler_params=pltpu.CompilerParams(
            dimension_semantics=("parallel",)),             # v7x: 2 TCs
    )(x, mask,
      packed["wqkv"], packed["bqkv"], packed["wo"], packed["bo"],
      packed["w1"], packed["b1"], packed["w2"], packed["b2"],
      packed["ln1_g"], packed["ln1_b"], packed["ln2_g"], packed["ln2_b"])


# ------------------------------ parameter utils -------------------------------
def _init_linear(key, out_f, in_f):
    # PyTorch layout: weight [out_features, in_features]
    w = jax.random.normal(key, (out_f, in_f), jnp.float32) * 0.02
    b = jnp.zeros((1, out_f), jnp.float32)
    return w, b


def init_params(key):
    ks = jax.random.split(key, 6)
    p = {}
    p["wq"], p["bq"] = _init_linear(ks[0], D_MODEL, D_MODEL)
    p["wk"], p["bk"] = _init_linear(ks[1], D_MODEL, D_MODEL)
    p["wv"], p["bv"] = _init_linear(ks[2], D_MODEL, D_MODEL)
    p["wo"], p["bo"] = _init_linear(ks[3], D_MODEL, D_MODEL)
    p["w1"], p["b1"] = _init_linear(ks[4], D_FF, D_MODEL)
    p["w2"], p["b2"] = _init_linear(ks[5], D_MODEL, D_FF)
    p["ln1_g"] = jnp.ones((1, D_MODEL), jnp.float32)
    p["ln1_b"] = jnp.zeros((1, D_MODEL), jnp.float32)
    p["ln2_g"] = jnp.ones((1, D_MODEL), jnp.float32)
    p["ln2_b"] = jnp.zeros((1, D_MODEL), jnp.float32)
    return p


def pack_params(p):
    """One-time layout prep: transpose weights to [in, out], fuse QKV, fold the
    1/sqrt(d_k) attention scale into the Q projection."""
    scale = 1.0 / math.sqrt(D_HEAD)
    return {
        "wqkv": jnp.concatenate([p["wq"].T * scale, p["wk"].T, p["wv"].T], axis=1),
        "bqkv": jnp.concatenate([p["bq"] * scale, p["bk"], p["bv"]], axis=1),
        "wo": p["wo"].T, "bo": p["bo"],
        "w1": p["w1"].T, "b1": p["b1"],
        "w2": p["w2"].T, "b2": p["b2"],
        "ln1_g": p["ln1_g"], "ln1_b": p["ln1_b"],
        "ln2_g": p["ln2_g"], "ln2_b": p["ln2_b"],
    }


# ------------------------------ pure-JAX reference ----------------------------
def reference_forward(x, p, mask=None):
    def ln(t, g, b):
        mu = t.mean(-1, keepdims=True)
        var = ((t - mu) ** 2).mean(-1, keepdims=True)
        return (t - mu) / jnp.sqrt(var + EPS) * g + b

    def lin(t, w, b):
        return t @ w.T + b[0]

    B, S, D = x.shape
    h = ln(x, p["ln1_g"][0], p["ln1_b"][0])
    q = lin(h, p["wq"], p["bq"]).reshape(B, S, N_HEADS, D_HEAD).transpose(0, 2, 1, 3)
    k = lin(h, p["wk"], p["bk"]).reshape(B, S, N_HEADS, D_HEAD).transpose(0, 2, 1, 3)
    v = lin(h, p["wv"], p["bv"]).reshape(B, S, N_HEADS, D_HEAD).transpose(0, 2, 1, 3)
    s = jnp.einsum("bhqd,bhkd->bhqk", q, k) / math.sqrt(D_HEAD)
    if mask is not None:
        s = jnp.where(jnp.asarray(mask).reshape(B, 1, 1, S) == 0, -1e9, s)
    prob = jax.nn.softmax(s, axis=-1)
    ctx = jnp.einsum("bhqk,bhkd->bhqd", prob, v).transpose(0, 2, 1, 3).reshape(B, S, D)
    x = x + lin(ctx, p["wo"], p["bo"])
    h = ln(x, p["ln2_g"][0], p["ln2_b"][0])
    f = lin(jnp.maximum(lin(h, p["w1"], p["b1"]), 0.0), p["w2"], p["b2"])
    return x + f


# ------------------------------------ main ------------------------------------
if __name__ == "__main__":
    key = jax.random.PRNGKey(0)
    kx, kp = jax.random.split(key)
    B, S = 2, 8
    x = jax.random.normal(kx, (B, S, D_MODEL), jnp.float32)
    params = init_params(kp)
    packed = pack_params(params)

    out = jax.block_until_ready(encoder_layer_forward(x, packed, mask=None))
    assert out.shape == (B, S, D_MODEL)
    assert bool(jnp.all(jnp.isfinite(out)))

    # numerics vs. pure-JAX reference (tolerance covers approx softmax recip)
    ref = reference_forward(x, params, mask=None)
    err = float(jnp.max(jnp.abs(out - ref)))
    assert err < 2e-2, f"mismatch vs reference: max abs err = {err}"

    # an all-ones mask must reproduce the mask=None result
    out_m = jax.block_until_ready(
        encoder_layer_forward(x, packed, mask=jnp.ones((B, 1, S), jnp.int32)))
    assert float(jnp.max(jnp.abs(out_m - out))) < 1e-5

    print("KERNEL_OK")
</pallas_src>

<mosaic_0001>
module attributes {stable_mosaic.version = 11 : i64} {
  func.func @_encoder_layer_kernel(%arg0: i32, %arg1: memref<1x8x32xf32, #tpu.memory_space<vmem>>, %arg2: memref<1x1x8xf32, #tpu.memory_space<vmem>>, %arg3: memref<32x96xf32, #tpu.memory_space<vmem>>, %arg4: memref<1x96xf32, #tpu.memory_space<vmem>>, %arg5: memref<32x32xf32, #tpu.memory_space<vmem>>, %arg6: memref<1x32xf32, #tpu.memory_space<vmem>>, %arg7: memref<32x64xf32, #tpu.memory_space<vmem>>, %arg8: memref<1x64xf32, #tpu.memory_space<vmem>>, %arg9: memref<64x32xf32, #tpu.memory_space<vmem>>, %arg10: memref<1x32xf32, #tpu.memory_space<vmem>>, %arg11: memref<1x32xf32, #tpu.memory_space<vmem>>, %arg12: memref<1x32xf32, #tpu.memory_space<vmem>>, %arg13: memref<1x32xf32, #tpu.memory_space<vmem>>, %arg14: memref<1x32xf32, #tpu.memory_space<vmem>>, %arg15: memref<1x8x32xf32, #tpu.memory_space<vmem>>) attributes {dimension_semantics = [#tpu.dimension_semantics<parallel>], iteration_bounds = array<i64: 2>, scalar_prefetch = 0 : i64, scratch_operands = 0 : i64, tpu.core_type = #tpu.core_type<tc>, window_params = [{transform_indices = @transform_0, window_bounds = array<i64: 1, 8, 32>}, {transform_indices = @transform_1, window_bounds = array<i64: 1, 1, 8>}, {pipeline_mode = #tpu.pipeline_mode<synchronous>, transform_indices = @transform_2, window_bounds = array<i64: 32, 96>}, {pipeline_mode = #tpu.pipeline_mode<synchronous>, transform_indices = @transform_3, window_bounds = array<i64: 1, 96>}, {pipeline_mode = #tpu.pipeline_mode<synchronous>, transform_indices = @transform_4, window_bounds = array<i64: 32, 32>}, {pipeline_mode = #tpu.pipeline_mode<synchronous>, transform_indices = @transform_5, window_bounds = array<i64: 1, 32>}, {pipeline_mode = #tpu.pipeline_mode<synchronous>, transform_indices = @transform_6, window_bounds = array<i64: 32, 64>}, {pipeline_mode = #tpu.pipeline_mode<synchronous>, transform_indices = @transform_7, window_bounds = array<i64: 1, 64>}, {pipeline_mode = #tpu.pipeline_mode<synchronous>, transform_indices = @transform_8, window_bounds = array<i64: 64, 32>}, {pipeline_mode = #tpu.pipeline_mode<synchronous>, transform_indices = @transform_9, window_bounds = array<i64: 1, 32>}, {pipeline_mode = #tpu.pipeline_mode<synchronous>, transform_indices = @transform_10, window_bounds = array<i64: 1, 32>}, {pipeline_mode = #tpu.pipeline_mode<synchronous>, transform_indices = @transform_11, window_bounds = array<i64: 1, 32>}, {pipeline_mode = #tpu.pipeline_mode<synchronous>, transform_indices = @transform_12, window_bounds = array<i64: 1, 32>}, {pipeline_mode = #tpu.pipeline_mode<synchronous>, transform_indices = @transform_13, window_bounds = array<i64: 1, 32>}, {transform_indices = @transform_14, window_bounds = array<i64: 1, 8, 32>}]} {
    %c0 = arith.constant 0 : index
    %c0_0 = arith.constant 0 : index
    %c0_1 = arith.constant 0 : index
    %0 = vector.load %arg1[%c0, %c0_0, %c0_1] : memref<1x8x32xf32, #tpu.memory_space<vmem>>, vector<1x8x32xf32>
    %1 = vector.shape_cast %0 : vector<1x8x32xf32> to vector<8x32xf32>
    %c0_2 = arith.constant 0 : index
    %c0_3 = arith.constant 0 : index
    %c0_4 = arith.constant 0 : index
    %2 = vector.load %arg2[%c0_2, %c0_3, %c0_4] : memref<1x1x8xf32, #tpu.memory_space<vmem>>, vector<1x1x8xf32>
    %3 = vector.shape_cast %2 : vector<1x1x8xf32> to vector<1x8xf32>
    %cst = arith.constant dense<0.000000e+00> : vector<8xf32>
    %4 = vector.multi_reduction <add>, %1, %cst [1] : vector<8x32xf32> to vector<8xf32>
    %5 = vector.shape_cast %4 : vector<8xf32> to vector<8x1xf32>
    %cst_5 = arith.constant 3.200000e+01 : f32
    %6 = vector.broadcast %cst_5 : f32 to vector<8x1xf32>
    %7 = arith.divf %5, %6 : vector<8x1xf32>
    %8 = vector.broadcast %7 : vector<8x1xf32> to vector<8x32xf32>
    %9 = arith.subf %1, %8 : vector<8x32xf32>
    %10 = arith.mulf %9, %9 : vector<8x32xf32>
    %cst_6 = arith.constant dense<0.000000e+00> : vector<8xf32>
    %11 = vector.multi_reduction <add>, %10, %cst_6 [1] : vector<8x32xf32> to vector<8xf32>
    %12 = vector.shape_cast %11 : vector<8xf32> to vector<8x1xf32>
    %cst_7 = arith.constant 3.200000e+01 : f32
    %13 = vector.broadcast %cst_7 : f32 to vector<8x1xf32>
    %14 = arith.divf %12, %13 : vector<8x1xf32>
    %15 = vector.broadcast %7 : vector<8x1xf32> to vector<8x32xf32>
    %16 = arith.subf %1, %15 : vector<8x32xf32>
    %cst_8 = arith.constant 9.99999974E-6 : f32
    %17 = vector.broadcast %cst_8 : f32 to vector<8x1xf32>
    %18 = arith.addf %14, %17 : vector<8x1xf32>
    %19 = math.rsqrt %18 : vector<8x1xf32>
    %20 = vector.broadcast %19 : vector<8x1xf32> to vector<8x32xf32>
    %21 = arith.mulf %16, %20 : vector<8x32xf32>
    %c0_9 = arith.constant 0 : index
    %c0_10 = arith.constant 0 : index
    %22 = vector.load %arg11[%c0_9, %c0_10] : memref<1x32xf32, #tpu.memory_space<vmem>>, vector<1x32xf32>
    %23 = vector.broadcast %22 : vector<1x32xf32> to vector<8x32xf32>
    %24 = arith.mulf %21, %23 : vector<8x32xf32>
    %c0_11 = arith.constant 0 : index
    %c0_12 = arith.constant 0 : index
    %25 = vector.load %arg12[%c0_11, %c0_12] : memref<1x32xf32, #tpu.memory_space<vmem>>, vector<1x32xf32>
    %26 = vector.broadcast %25 : vector<1x32xf32> to vector<8x32xf32>
    %27 = arith.addf %24, %26 : vector<8x32xf32>
    %c0_13 = arith.constant 0 : index
    %c0_14 = arith.constant 0 : index
    %28 = vector.load %arg3[%c0_13, %c0_14] : memref<32x96xf32, #tpu.memory_space<vmem>>, vector<32x96xf32>
    %cst_15 = arith.constant dense<0.000000e+00> : vector<8x96xf32>
    %29 = tpu.matmul %27, %28, %cst_15 {dimension_numbers = #tpu.dot_dimension_numbers<[1], [0], [0], [1], [0, 0, 1, 1], [], []>} : vector<8x32xf32>, vector<32x96xf32>, vector<8x96xf32> -> vector<8x96xf32>
    %c0_16 = arith.constant 0 : index
    %c0_17 = arith.constant 0 : index
    %30 = vector.load %arg4[%c0_16, %c0_17] : memref<1x96xf32, #tpu.memory_space<vmem>>, vector<1x96xf32>
    %31 = vector.broadcast %30 : vector<1x96xf32> to vector<8x96xf32>
    %32 = arith.addf %29, %31 : vector<8x96xf32>
    %c0_18 = arith.constant 0 : index
    %c0_19 = arith.constant 0 : index
    %33 = vector.load %arg5[%c0_18, %c0_19] : memref<32x32xf32, #tpu.memory_space<vmem>>, vector<32x32xf32>
    %34 = vector.extract_strided_slice %32 {offsets = [0, 0], sizes = [8, 8], strides = [1, 1]} : vector<8x96xf32> to vector<8x8xf32>
    %35 = vector.extract_strided_slice %32 {offsets = [0, 32], sizes = [8, 8], strides = [1, 1]} : vector<8x96xf32> to vector<8x8xf32>
    %36 = vector.extract_strided_slice %32 {offsets = [0, 64], sizes = [8, 8], strides = [1, 1]} : vector<8x96xf32> to vector<8x8xf32>
    %37 = tpu.transpose %35, [1, 0] : vector<8x8xf32> -> vector<8x8xf32>
    %cst_20 = arith.constant dense<0.000000e+00> : vector<8x8xf32>
    %38 = tpu.matmul %34, %37, %cst_20 {dimension_numbers = #tpu.dot_dimension_numbers<[1], [0], [0], [1], [0, 0, 1, 1], [], []>} : vector<8x8xf32>, vector<8x8xf32>, vector<8x8xf32> -> vector<8x8xf32>
    %cst_21 = arith.constant 0.000000e+00 : f32
    %39 = vector.broadcast %cst_21 : f32 to vector<1x8xf32>
    %40 = arith.cmpf oeq, %3, %39 : vector<1x8xf32>
    %cst_22 = arith.constant -1.000000e+09 : f32
    %41 = vector.shape_cast %40 : vector<1x8xi1> to vector<1x8xi1>
    %42 = vector.broadcast %41 : vector<1x8xi1> to vector<8x8xi1>
    %43 = vector.broadcast %cst_22 : f32 to vector<8x8xf32>
    %44 = arith.select %42, %43, %38 : vector<8x8xi1>, vector<8x8xf32>
    %cst_23 = arith.constant dense<0xFF800000> : vector<8xf32>
    %45 = vector.multi_reduction <maximumf>, %44, %cst_23 [1] : vector<8x8xf32> to vector<8xf32>
    %46 = vector.shape_cast %45 : vector<8xf32> to vector<8x1xf32>
    %47 = vector.broadcast %46 : vector<8x1xf32> to vector<8x8xf32>
    %48 = arith.subf %44, %47 : vector<8x8xf32>
    %49 = math.exp %48 : vector<8x8xf32>
    %cst_24 = arith.constant dense<0.000000e+00> : vector<8xf32>
    %50 = vector.multi_reduction <add>, %49, %cst_24 [1] : vector<8x8xf32> to vector<8xf32>
    %51 = vector.shape_cast %50 : vector<8xf32> to vector<8x1xf32>
    %52 = tpu.reciprocal %51 {approx = true} : vector<8x1xf32> -> vector<8x1xf32>
    %53 = vector.broadcast %52 : vector<8x1xf32> to vector<8x8xf32>
    %54 = arith.mulf %49, %53 : vector<8x8xf32>
    %cst_25 = arith.constant dense<0.000000e+00> : vector<8x8xf32>
    %55 = tpu.matmul %54, %36, %cst_25 {dimension_numbers = #tpu.dot_dimension_numbers<[1], [0], [0], [1], [0, 0, 1, 1], [], []>} : vector<8x8xf32>, vector<8x8xf32>, vector<8x8xf32> -> vector<8x8xf32>
    %56 = vector.extract_strided_slice %33 {offsets = [0, 0], sizes = [8, 32], strides = [1, 1]} : vector<32x32xf32> to vector<8x32xf32>
    %cst_26 = arith.constant dense<0.000000e+00> : vector<8x32xf32>
    %57 = tpu.matmul %55, %56, %cst_26 {dimension_numbers = #tpu.dot_dimension_numbers<[1], [0], [0], [1], [0, 0, 1, 1], [], []>} : vector<8x8xf32>, vector<8x32xf32>, vector<8x32xf32> -> vector<8x32xf32>
    %58 = vector.extract_strided_slice %32 {offsets = [0, 8], sizes = [8, 8], strides = [1, 1]} : vector<8x96xf32> to vector<8x8xf32>
    %59 = vector.extract_strided_slice %32 {offsets = [0, 40], sizes = [8, 8], strides = [1, 1]} : vector<8x96xf32> to vector<8x8xf32>
    %60 = vector.extract_strided_slice %32 {offsets = [0, 72], sizes = [8, 8], strides = [1, 1]} : vector<8x96xf32> to vector<8x8xf32>
    %61 = tpu.transpose %59, [1, 0] : vector<8x8xf32> -> vector<8x8xf32>
    %cst_27 = arith.constant dense<0.000000e+00> : vector<8x8xf32>
    %62 = tpu.matmul %58, %61, %cst_27 {dimension_numbers = #tpu.dot_dimension_numbers<[1], [0], [0], [1], [0, 0, 1, 1], [], []>} : vector<8x8xf32>, vector<8x8xf32>, vector<8x8xf32> -> vector<8x8xf32>
    %cst_28 = arith.constant 0.000000e+00 : f32
    %63 = vector.broadcast %cst_28 : f32 to vector<1x8xf32>
    %64 = arith.cmpf oeq, %3, %63 : vector<1x8xf32>
    %cst_29 = arith.constant -1.000000e+09 : f32
    %65 = vector.shape_cast %64 : vector<1x8xi1> to vector<1x8xi1>
    %66 = vector.broadcast %65 : vector<1x8xi1> to vector<8x8xi1>
    %67 = vector.broadcast %cst_29 : f32 to vector<8x8xf32>
    %68 = arith.select %66, %67, %62 : vector<8x8xi1>, vector<8x8xf32>
    %cst_30 = arith.constant dense<0xFF800000> : vector<8xf32>
    %69 = vector.multi_reduction <maximumf>, %68, %cst_30 [1] : vector<8x8xf32> to vector<8xf32>
    %70 = vector.shape_cast %69 : vector<8xf32> to vector<8x1xf32>
    %71 = vector.broadcast %70 : vector<8x1xf32> to vector<8x8xf32>
    %72 = arith.subf %68, %71 : vector<8x8xf32>
    %73 = math.exp %72 : vector<8x8xf32>
    %cst_31 = arith.constant dense<0.000000e+00> : vector<8xf32>
    %74 = vector.multi_reduction <add>, %73, %cst_31 [1] : vector<8x8xf32> to vector<8xf32>
    %75 = vector.shape_cast %74 : vector<8xf32> to vector<8x1xf32>
    %76 = tpu.reciprocal %75 {approx = true} : vector<8x1xf32> -> vector<8x1xf32>
    %77 = vector.broadcast %76 : vector<8x1xf32> to vector<8x8xf32>
    %78 = arith.mulf %73, %77 : vector<8x8xf32>
    %cst_32 = arith.constant dense<0.000000e+00> : vector<8x8xf32>
    %79 = tpu.matmul %78, %60, %cst_32 {dimension_numbers = #tpu.dot_dimension_numbers<[1], [0], [0], [1], [0, 0, 1, 1], [], []>} : vector<8x8xf32>, vector<8x8xf32>, vector<8x8xf32> -> vector<8x8xf32>
    %80 = vector.extract_strided_slice %33 {offsets = [8, 0], sizes = [8, 32], strides = [1, 1]} : vector<32x32xf32> to vector<8x32xf32>
    %cst_33 = arith.constant dense<0.000000e+00> : vector<8x32xf32>
    %81 = tpu.matmul %79, %80, %cst_33 {dimension_numbers = #tpu.dot_dimension_numbers<[1], [0], [0], [1], [0, 0, 1, 1], [], []>} : vector<8x8xf32>, vector<8x32xf32>, vector<8x32xf32> -> vector<8x32xf32>
    %82 = arith.addf %57, %81 : vector<8x32xf32>
    %83 = vector.extract_strided_slice %32 {offsets = [0, 16], sizes = [8, 8], strides = [1, 1]} : vector<8x96xf32> to vector<8x8xf32>
    %84 = vector.extract_strided_slice %32 {offsets = [0, 48], sizes = [8, 8], strides = [1, 1]} : vector<8x96xf32> to vector<8x8xf32>
    %85 = vector.extract_strided_slice %32 {offsets = [0, 80], sizes = [8, 8], strides = [1, 1]} : vector<8x96xf32> to vector<8x8xf32>
    %86 = tpu.transpose %84, [1, 0] : vector<8x8xf32> -> vector<8x8xf32>
    %cst_34 = arith.constant dense<0.000000e+00> : vector<8x8xf32>
    %87 = tpu.matmul %83, %86, %cst_34 {dimension_numbers = #tpu.dot_dimension_numbers<[1], [0], [0], [1], [0, 0, 1, 1], [], []>} : vector<8x8xf32>, vector<8x8xf32>, vector<8x8xf32> -> vector<8x8xf32>
    %cst_35 = arith.constant 0.000000e+00 : f32
    %88 = vector.broadcast %cst_35 : f32 to vector<1x8xf32>
    %89 = arith.cmpf oeq, %3, %88 : vector<1x8xf32>
    %cst_36 = arith.constant -1.000000e+09 : f32
    %90 = vector.shape_cast %89 : vector<1x8xi1> to vector<1x8xi1>
    %91 = vector.broadcast %90 : vector<1x8xi1> to vector<8x8xi1>
    %92 = vector.broadcast %cst_36 : f32 to vector<8x8xf32>
    %93 = arith.select %91, %92, %87 : vector<8x8xi1>, vector<8x8xf32>
    %cst_37 = arith.constant dense<0xFF800000> : vector<8xf32>
    %94 = vector.multi_reduction <maximumf>, %93, %cst_37 [1] : vector<8x8xf32> to vector<8xf32>
    %95 = vector.shape_cast %94 : vector<8xf32> to vector<8x1xf32>
    %96 = vector.broadcast %95 : vector<8x1xf32> to vector<8x8xf32>
    %97 = arith.subf %93, %96 : vector<8x8xf32>
    %98 = math.exp %97 : vector<8x8xf32>
    %cst_38 = arith.constant dense<0.000000e+00> : vector<8xf32>
    %99 = vector.multi_reduction <add>, %98, %cst_38 [1] : vector<8x8xf32> to vector<8xf32>
    %100 = vector.shape_cast %99 : vector<8xf32> to vector<8x1xf32>
    %101 = tpu.reciprocal %100 {approx = true} : vector<8x1xf32> -> vector<8x1xf32>
    %102 = vector.broadcast %101 : vector<8x1xf32> to vector<8x8xf32>
    %103 = arith.mulf %98, %102 : vector<8x8xf32>
    %cst_39 = arith.constant dense<0.000000e+00> : vector<8x8xf32>
    %104 = tpu.matmul %103, %85, %cst_39 {dimension_numbers = #tpu.dot_dimension_numbers<[1], [0], [0], [1], [0, 0, 1, 1], [], []>} : vector<8x8xf32>, vector<8x8xf32>, vector<8x8xf32> -> vector<8x8xf32>
    %105 = vector.extract_strided_slice %33 {offsets = [16, 0], sizes = [8, 32], strides = [1, 1]} : vector<32x32xf32> to vector<8x32xf32>
    %cst_40 = arith.constant dense<0.000000e+00> : vector<8x32xf32>
    %106 = tpu.matmul %104, %105, %cst_40 {dimension_numbers = #tpu.dot_dimension_numbers<[1], [0], [0], [1], [0, 0, 1, 1], [], []>} : vector<8x8xf32>, vector<8x32xf32>, vector<8x32xf32> -> vector<8x32xf32>
    %107 = arith.addf %82, %106 : vector<8x32xf32>
    %108 = vector.extract_strided_slice %32 {offsets = [0, 24], sizes = [8, 8], strides = [1, 1]} : vector<8x96xf32> to vector<8x8xf32>
    %109 = vector.extract_strided_slice %32 {offsets = [0, 56], sizes = [8, 8], strides = [1, 1]} : vector<8x96xf32> to vector<8x8xf32>
    %110 = vector.extract_strided_slice %32 {offsets = [0, 88], sizes = [8, 8], strides = [1, 1]} : vector<8x96xf32> to vector<8x8xf32>
    %111 = tpu.transpose %109, [1, 0] : vector<8x8xf32> -> vector<8x8xf32>
    %cst_41 = arith.constant dense<0.000000e+00> : vector<8x8xf32>
    %112 = tpu.matmul %108, %111, %cst_41 {dimension_numbers = #tpu.dot_dimension_numbers<[1], [0], [0], [1], [0, 0, 1, 1], [], []>} : vector<8x8xf32>, vector<8x8xf32>, vector<8x8xf32> -> vector<8x8xf32>
    %cst_42 = arith.constant 0.000000e+00 : f32
    %113 = vector.broadcast %cst_42 : f32 to vector<1x8xf32>
    %114 = arith.cmpf oeq, %3, %113 : vector<1x8xf32>
    %cst_43 = arith.constant -1.000000e+09 : f32
    %115 = vector.shape_cast %114 : vector<1x8xi1> to vector<1x8xi1>
    %116 = vector.broadcast %115 : vector<1x8xi1> to vector<8x8xi1>
    %117 = vector.broadcast %cst_43 : f32 to vector<8x8xf32>
    %118 = arith.select %116, %117, %112 : vector<8x8xi1>, vector<8x8xf32>
    %cst_44 = arith.constant dense<0xFF800000> : vector<8xf32>
    %119 = vector.multi_reduction <maximumf>, %118, %cst_44 [1] : vector<8x8xf32> to vector<8xf32>
    %120 = vector.shape_cast %119 : vector<8xf32> to vector<8x1xf32>
    %121 = vector.broadcast %120 : vector<8x1xf32> to vector<8x8xf32>
    %122 = arith.subf %118, %121 : vector<8x8xf32>
    %123 = math.exp %122 : vector<8x8xf32>
    %cst_45 = arith.constant dense<0.000000e+00> : vector<8xf32>
    %124 = vector.multi_reduction <add>, %123, %cst_45 [1] : vector<8x8xf32> to vector<8xf32>
    %125 = vector.shape_cast %124 : vector<8xf32> to vector<8x1xf32>
    %126 = tpu.reciprocal %125 {approx = true} : vector<8x1xf32> -> vector<8x1xf32>
    %127 = vector.broadcast %126 : vector<8x1xf32> to vector<8x8xf32>
    %128 = arith.mulf %123, %127 : vector<8x8xf32>
    %cst_46 = arith.constant dense<0.000000e+00> : vector<8x8xf32>
    %129 = tpu.matmul %128, %110, %cst_46 {dimension_numbers = #tpu.dot_dimension_numbers<[1], [0], [0], [1], [0, 0, 1, 1], [], []>} : vector<8x8xf32>, vector<8x8xf32>, vector<8x8xf32> -> vector<8x8xf32>
    %130 = vector.extract_strided_slice %33 {offsets = [24, 0], sizes = [8, 32], strides = [1, 1]} : vector<32x32xf32> to vector<8x32xf32>
    %cst_47 = arith.constant dense<0.000000e+00> : vector<8x32xf32>
    %131 = tpu.matmul %129, %130, %cst_47 {dimension_numbers = #tpu.dot_dimension_numbers<[1], [0], [0], [1], [0, 0, 1, 1], [], []>} : vector<8x8xf32>, vector<8x32xf32>, vector<8x32xf32> -> vector<8x32xf32>
    %132 = arith.addf %107, %131 : vector<8x32xf32>
    %133 = arith.addf %1, %132 : vector<8x32xf32>
    %c0_48 = arith.constant 0 : index
    %c0_49 = arith.constant 0 : index
    %134 = vector.load %arg6[%c0_48, %c0_49] : memref<1x32xf32, #tpu.memory_space<vmem>>, vector<1x32xf32>
    %135 = vector.broadcast %134 : vector<1x32xf32> to vector<8x32xf32>
    %136 = arith.addf %133, %135 : vector<8x32xf32>
    %cst_50 = arith.constant dense<0.000000e+00> : vector<8xf32>
    %137 = vector.multi_reduction <add>, %136, %cst_50 [1] : vector<8x32xf32> to vector<8xf32>
    %138 = vector.shape_cast %137 : vector<8xf32> to vector<8x1xf32>
    %cst_51 = arith.constant 3.200000e+01 : f32
    %139 = vector.broadcast %cst_51 : f32 to vector<8x1xf32>
    %140 = arith.divf %138, %139 : vector<8x1xf32>
    %141 = vector.broadcast %140 : vector<8x1xf32> to vector<8x32xf32>
    %142 = arith.subf %136, %141 : vector<8x32xf32>
    %143 = arith.mulf %142, %142 : vector<8x32xf32>
    %cst_52 = arith.constant dense<0.000000e+00> : vector<8xf32>
    %144 = vector.multi_reduction <add>, %143, %cst_52 [1] : vector<8x32xf32> to vector<8xf32>
    %145 = vector.shape_cast %144 : vector<8xf32> to vector<8x1xf32>
    %cst_53 = arith.constant 3.200000e+01 : f32
    %146 = vector.broadcast %cst_53 : f32 to vector<8x1xf32>
    %147 = arith.divf %145, %146 : vector<8x1xf32>
    %148 = vector.broadcast %140 : vector<8x1xf32> to vector<8x32xf32>
    %149 = arith.subf %136, %148 : vector<8x32xf32>
    %cst_54 = arith.constant 9.99999974E-6 : f32
    %150 = vector.broadcast %cst_54 : f32 to vector<8x1xf32>
    %151 = arith.addf %147, %150 : vector<8x1xf32>
    %152 = math.rsqrt %151 : vector<8x1xf32>
    %153 = vector.broadcast %152 : vector<8x1xf32> to vector<8x32xf32>
    %154 = arith.mulf %149, %153 : vector<8x32xf32>
    %c0_55 = arith.constant 0 : index
    %c0_56 = arith.constant 0 : index
    %155 = vector.load %arg13[%c0_55, %c0_56] : memref<1x32xf32, #tpu.memory_space<vmem>>, vector<1x32xf32>
    %156 = vector.broadcast %155 : vector<1x32xf32> to vector<8x32xf32>
    %157 = arith.mulf %154, %156 : vector<8x32xf32>
    %c0_57 = arith.constant 0 : index
    %c0_58 = arith.constant 0 : index
    %158 = vector.load %arg14[%c0_57, %c0_58] : memref<1x32xf32, #tpu.memory_space<vmem>>, vector<1x32xf32>
    %159 = vector.broadcast %158 : vector<1x32xf32> to vector<8x32xf32>
    %160 = arith.addf %157, %159 : vector<8x32xf32>
    %c0_59 = arith.constant 0 : index
    %c0_60 = arith.constant 0 : index
    %161 = vector.load %arg7[%c0_59, %c0_60] : memref<32x64xf32, #tpu.memory_space<vmem>>, vector<32x64xf32>
    %cst_61 = arith.constant dense<0.000000e+00> : vector<8x64xf32>
    %162 = tpu.matmul %160, %161, %cst_61 {dimension_numbers = #tpu.dot_dimension_numbers<[1], [0], [0], [1], [0, 0, 1, 1], [], []>} : vector<8x32xf32>, vector<32x64xf32>, vector<8x64xf32> -> vector<8x64xf32>
    %c0_62 = arith.constant 0 : index
    %c0_63 = arith.constant 0 : index
    %163 = vector.load %arg8[%c0_62, %c0_63] : memref<1x64xf32, #tpu.memory_space<vmem>>, vector<1x64xf32>
    %164 = vector.broadcast %163 : vector<1x64xf32> to vector<8x64xf32>
    %165 = arith.addf %162, %164 : vector<8x64xf32>
    %cst_64 = arith.constant 0.000000e+00 : f32
    %166 = vector.broadcast %cst_64 : f32 to vector<8x64xf32>
    %167 = arith.maximumf %165, %166 : vector<8x64xf32>
    %c0_65 = arith.constant 0 : index
    %c0_66 = arith.constant 0 : index
    %168 = vector.load %arg9[%c0_65, %c0_66] : memref<64x32xf32, #tpu.memory_space<vmem>>, vector<64x32xf32>
    %cst_67 = arith.constant dense<0.000000e+00> : vector<8x32xf32>
    %169 = tpu.matmul %167, %168, %cst_67 {dimension_numbers = #tpu.dot_dimension_numbers<[1], [0], [0], [1], [0, 0, 1, 1], [], []>} : vector<8x64xf32>, vector<64x32xf32>, vector<8x32xf32> -> vector<8x32xf32>
    %c0_68 = arith.constant 0 : index
    %c0_69 = arith.constant 0 : index
    %170 = vector.load %arg10[%c0_68, %c0_69] : memref<1x32xf32, #tpu.memory_space<vmem>>, vector<1x32xf32>
    %171 = vector.broadcast %170 : vector<1x32xf32> to vector<8x32xf32>
    %172 = arith.addf %169, %171 : vector<8x32xf32>
    %173 = arith.addf %136, %172 : vector<8x32xf32>
    %c0_70 = arith.constant 0 : index
    %c0_71 = arith.constant 0 : index
    %c0_72 = arith.constant 0 : index
    %174 = vector.load %arg15[%c0_70, %c0_71, %c0_72] : memref<1x8x32xf32, #tpu.memory_space<vmem>>, vector<1x8x32xf32>
    %175 = vector.shape_cast %174 : vector<1x8x32xf32> to vector<8x32xf32>
    %176 = vector.shape_cast %173 : vector<8x32xf32> to vector<1x8x32xf32>
    tpu.vector_store %arg15[%c0_70, %c0_71, %c0_72], %176 {strides = array<i32>} : memref<1x8x32xf32, #tpu.memory_space<vmem>>, vector<1x8x32xf32>,
    return
  }
  func.func @transform_0(%arg0: i32) -> (i32, i32, i32) {
    %c0_i32 = arith.constant 0 : i32
    %c0_i32_0 = arith.constant 0 : i32
    %c0_i32_1 = arith.constant 0 : i32
    return %arg0, %c0_i32, %c0_i32_0 : i32, i32, i32
  }
  func.func @transform_1(%arg0: i32) -> (i32, i32, i32) {
    %c0_i32 = arith.constant 0 : i32
    %c0_i32_0 = arith.constant 0 : i32
    %c0_i32_1 = arith.constant 0 : i32
    return %arg0, %c0_i32, %c0_i32_0 : i32, i32, i32
  }
  func.func @transform_2(%arg0: i32) -> (i32, i32) {
    %c0_i32 = arith.constant 0 : i32
    %c0_i32_0 = arith.constant 0 : i32
    %c0_i32_1 = arith.constant 0 : i32
    return %c0_i32, %c0_i32_0 : i32, i32
  }
  func.func @transform_3(%arg0: i32) -> (i32, i32) {
    %c0_i32 = arith.constant 0 : i32
    %c0_i32_0 = arith.constant 0 : i32
    %c0_i32_1 = arith.constant 0 : i32
    return %c0_i32, %c0_i32_0 : i32, i32
  }
  func.func @transform_4(%arg0: i32) -> (i32, i32) {
    %c0_i32 = arith.constant 0 : i32
    %c0_i32_0 = arith.constant 0 : i32
    %c0_i32_1 = arith.constant 0 : i32
    return %c0_i32, %c0_i32_0 : i32, i32
  }
  func.func @transform_5(%arg0: i32) -> (i32, i32) {
    %c0_i32 = arith.constant 0 : i32
    %c0_i32_0 = arith.constant 0 : i32
    %c0_i32_1 = arith.constant 0 : i32
    return %c0_i32, %c0_i32_0 : i32, i32
  }
  func.func @transform_6(%arg0: i32) -> (i32, i32) {
    %c0_i32 = arith.constant 0 : i32
    %c0_i32_0 = arith.constant 0 : i32
    %c0_i32_1 = arith.constant 0 : i32
    return %c0_i32, %c0_i32_0 : i32, i32
  }
  func.func @transform_7(%arg0: i32) -> (i32, i32) {
    %c0_i32 = arith.constant 0 : i32
    %c0_i32_0 = arith.constant 0 : i32
    %c0_i32_1 = arith.constant 0 : i32
    return %c0_i32, %c0_i32_0 : i32, i32
  }
  func.func @transform_8(%arg0: i32) -> (i32, i32) {
    %c0_i32 = arith.constant 0 : i32
    %c0_i32_0 = arith.constant 0 : i32
    %c0_i32_1 = arith.constant 0 : i32
    return %c0_i32, %c0_i32_0 : i32, i32
  }
  func.func @transform_9(%arg0: i32) -> (i32, i32) {
    %c0_i32 = arith.constant 0 : i32
    %c0_i32_0 = arith.constant 0 : i32
    %c0_i32_1 = arith.constant 0 : i32
    return %c0_i32, %c0_i32_0 : i32, i32
  }
  func.func @transform_10(%arg0: i32) -> (i32, i32) {
    %c0_i32 = arith.constant 0 : i32
    %c0_i32_0 = arith.constant 0 : i32
    %c0_i32_1 = arith.constant 0 : i32
    return %c0_i32, %c0_i32_0 : i32, i32
  }
  func.func @transform_11(%arg0: i32) -> (i32, i32) {
    %c0_i32 = arith.constant 0 : i32
    %c0_i32_0 = arith.constant 0 : i32
    %c0_i32_1 = arith.constant 0 : i32
    return %c0_i32, %c0_i32_0 : i32, i32
  }
  func.func @transform_12(%arg0: i32) -> (i32, i32) {
    %c0_i32 = arith.constant 0 : i32
    %c0_i32_0 = arith.constant 0 : i32
    %c0_i32_1 = arith.constant 0 : i32
    return %c0_i32, %c0_i32_0 : i32, i32
  }
  func.func @transform_13(%arg0: i32) -> (i32, i32) {
    %c0_i32 = arith.constant 0 : i32
    %c0_i32_0 = arith.constant 0 : i32
    %c0_i32_1 = arith.constant 0 : i32
    return %c0_i32, %c0_i32_0 : i32, i32
  }
  func.func @transform_14(%arg0: i32) -> (i32, i32, i32) {
    %c0_i32 = arith.constant 0 : i32
    %c0_i32_0 = arith.constant 0 : i32
    %c0_i32_1 = arith.constant 0 : i32
    return %arg0, %c0_i32, %c0_i32_0 : i32, i32, i32
  }
}

</mosaic_0001>

<llo_original>
// kernel: tpu_custom_call.1
$region0: #{tpu_custom_call.1}
  #allocation0 [shape = 'u32[]', space=smem, size = 0x4, offset = 0x4, fixed_abs, tag = 'smem constant byte address 0x4 - core index']
  #allocation1 [shape = 'u32[144,128]{1,0:T(1,128)}', space=vmem, size = 0x12000, scoped, tag = 'internal scratch']
  %s0 = inlined_call_operand.hbm [shape: f32[2,8,32], index: 0, kind: input, shape index: {}]
  %s1 = inlined_call_operand.vmem [shape: f32[2,1,8], index: 1, kind: input, shape index: {}]
  %s2 = inlined_call_operand.vmem [shape: f32[32,96], index: 2, kind: input, shape index: {}]
  %s3 = inlined_call_operand.vmem [shape: f32[1,96], index: 3, kind: input, shape index: {}]
  %s4 = inlined_call_operand.vmem [shape: f32[32,32], index: 4, kind: input, shape index: {}]
  %s5 = inlined_call_operand.vmem [shape: f32[1,32], index: 5, kind: input, shape index: {}]
  %s6 = inlined_call_operand.vmem [shape: f32[32,64], index: 6, kind: input, shape index: {}]
  %s7 = inlined_call_operand.vmem [shape: f32[1,64], index: 7, kind: input, shape index: {}]
  %s8 = inlined_call_operand.vmem [shape: f32[64,32], index: 8, kind: input, shape index: {}]
  %s9 = inlined_call_operand.vmem [shape: f32[1,32], index: 9, kind: input, shape index: {}]
  %s10 = inlined_call_operand.vmem [shape: f32[1,32], index: 10, kind: input, shape index: {}]
  %s11 = inlined_call_operand.vmem [shape: f32[1,32], index: 11, kind: input, shape index: {}]
  %s12 = inlined_call_operand.vmem [shape: f32[1,32], index: 12, kind: input, shape index: {}]
  %s13 = inlined_call_operand.vmem [shape: f32[1,32], index: 13, kind: input, shape index: {}]
  %s14 = inlined_call_operand.hbm [shape: f32[2,8,32], index: 14, kind: output, shape index: {}]
  %s15 = sld [smem:[#allocation0]]
  $region93: #{tpu_custom_call.1} parent=0
    _
  %s17 = ssub.s32 1, %s15
  %s18 = scalar_select 0, %s17, %s15
  $region1: #{tpu_custom_call.1} parent=0
    #allocation2 [shape = 'u8[8192]{0}', space=vmem, size = 0x2000, scoped, tag = 'input window, operand 0']
    #allocation3 [shape = 's32[2]{0}', space=sflag, size = 0x8, scoped, tag = 'scoped memory for tpu_custom_call.1']
    #allocation4 [shape = 's32[2]{0}', space=sflag, size = 0x8, scoped, tag = 'scoped memory for tpu_custom_call.1']
    #allocation5 [shape = 'u8[8192]{0}', space=vmem, size = 0x2000, scoped, tag = 'output window, operand 0']
    %19 = vsyncpa [#allocation3], 0
    %s20 = scalar_lea.sflag [#allocation3], 1
    %21 = vsyncpa %s20, 0
    %22 = vsyncpa [#allocation4], 0
    %s23 = scalar_lea.sflag [#allocation4], 1
    %24 = vsyncpa %s23, 0
    loop: start=0, step=1, limit=4
    $region2: #{tpu_custom_call.1} parent=1 // loop_pre_header
      _
    $region3: #{tpu_custom_call.1} parent=1 // loop_header
      %s26 = sphi 0, %s30
      %p27 = scmp.ge.s32.totalorder %s26, 4
      %s36 = sphi 0, %s38
      %s39 = sphi 0, %s36
      %s40 = sphi 0, %s39
      %s56 = sphi 0, %s40
      %s62 = sphi 0, %s64
      %s65 = sphi 0, %s62
      %s66 = sphi 0, %s65
      %s82 = sphi 0, %s66
      %s86 = sphi 0, %s86
      %s88 = sphi 0, %s86
      %s89 = sphi 0, %s88
      %s103 = sphi 0, %s89
      %s107 = sphi 0, %s107
      %s109 = sphi 0, %s107
      %s110 = sphi 0, %s109
      %s124 = sphi 0, %s110
      %s128 = sphi 0, %s128
      %s130 = sphi 0, %s128
      %s131 = sphi 0, %s130
      %s145 = sphi 0, %s131
      %s149 = sphi 0, %s149
      %s151 = sphi 0, %s149
      %s152 = sphi 0, %s151
      %s166 = sphi 0, %s152
      %s170 = sphi 0, %s170
      %s172 = sphi 0, %s170
      %s173 = sphi 0, %s172
      %s187 = sphi 0, %s173
      %s191 = sphi 0, %s191
      %s193 = sphi 0, %s191
      %s194 = sphi 0, %s193
      %s208 = sphi 0, %s194
      %s212 = sphi 0, %s212
      %s214 = sphi 0, %s212
      %s215 = sphi 0, %s214
      %s229 = sphi 0, %s215
      %s233 = sphi 0, %s233
      %s235 = sphi 0, %s233
      %s236 = sphi 0, %s235
      %s250 = sphi 0, %s236
      %s254 = sphi 0, %s254
      %s256 = sphi 0, %s254
      %s257 = sphi 0, %s256
      %s271 = sphi 0, %s257
      %s275 = sphi 0, %s275
      %s277 = sphi 0, %s275
      %s278 = sphi 0, %s277
      %s292 = sphi 0, %s278
      %s296 = sphi 0, %s296
      %s298 = sphi 0, %s296
      %s299 = sphi 0, %s298
      %s313 = sphi 0, %s299
      %s317 = sphi 0, %s317
      %s319 = sphi 0, %s317
      %s320 = sphi 0, %s319
      %s334 = sphi 0, %s320
      %s340 = sphi 0, %s342
      %s343 = sphi 0, %s340
      %s344 = sphi 0, %s343
      %s360 = sphi 0, %s344
    $region4: #{tpu_custom_call.1} parent=1 // loop_header_branch
      %29 = sbr.rel (%p27) target = $region8
    $region5: #{tpu_custom_call.1} parent=1 // loop_body
      %s31 = ssub.s32 %s26, 1
      %s32 = ssub.s32 %s26, 2
      %s33 = sadd.s32 %s26, 1
      %s34 = ssub.s32 %s26, %s33
      %p35 = scmp.eq.s32.totalorder %s34, 0
      %s37 = sadd.s32 %s36, 1
      %s38 = scalar_select %p35, %s36, %s37
      %p41 = pneg %p35
      %p42 = scmp.eq.s32.totalorder %s26, 1
      %p43 = por %p41, %p42
      %p44 = scmp.ne.s32.totalorder %s36, %s39
      %p45 = scmp.eq.s32.totalorder %s26, 0
      %p46 = por %p44, %p45
      %p47 = scmp.ne.s32.totalorder %s36, %s39
      %p48 = scmp.eq.s32.totalorder %s31, 1
      %p49 = por %p47, %p48
      %p50 = scmp.ne.s32.totalorder %s39, %s40
      %p51 = scmp.eq.s32.totalorder %s31, 0
      %p52 = por %p50, %p51
      %p53 = scmp.ne.s32.totalorder %s39, %s40
      %p54 = scmp.eq.s32.totalorder %s32, 1
      %p55 = por %p53, %p54
      %p57 = scmp.ne.s32.totalorder %s40, %s56
      %p58 = scmp.eq.s32.totalorder %s32, 0
      %p59 = por %p57, %p58
      %s60 = ssub.s32 %s26, %s33
      %p61 = scmp.eq.s32.totalorder %s60, 0
      %s63 = sadd.s32 %s62, 1
      %s64 = scalar_select %p61, %s62, %s63
      %p67 = pneg %p61
      %p68 = scmp.eq.s32.totalorder %s26, 1
      %p69 = por %p67, %p68
      %p70 = scmp.ne.s32.totalorder %s62, %s65
      %p71 = scmp.eq.s32.totalorder %s26, 0
      %p72 = por %p70, %p71
      %p73 = scmp.ne.s32.totalorder %s62, %s65
      %p74 = scmp.eq.s32.totalorder %s31, 1
      %p75 = por %p73, %p74
      %p76 = scmp.ne.s32.totalorder %s65, %s66
      %p77 = scmp.eq.s32.totalorder %s31, 0
      %p78 = por %p76, %p77
      %p79 = scmp.ne.s32.totalorder %s65, %s66
      %p80 = scmp.eq.s32.totalorder %s32, 1
      %p81 = por %p79, %p80
      %p83 = scmp.ne.s32.totalorder %s66, %s82
      %p84 = scmp.eq.s32.totalorder %s32, 0
      %p85 = por %p83, %p84
      %s87 = sadd.s32 %s86, 1
      %p90 = scmp.eq.s32.totalorder %s26, 1
      %p91 = scmp.ne.s32.totalorder %s86, %s88
      %p92 = scmp.eq.s32.totalorder %s26, 0
      %p93 = por %p91, %p92
      %p94 = scmp.ne.s32.totalorder %s86, %s88
      %p95 = scmp.eq.s32.totalorder %s31, 1
      %p96 = por %p94, %p95
      %p97 = scmp.ne.s32.totalorder %s88, %s89
      %p98 = scmp.eq.s32.totalorder %s31, 0
      %p99 = por %p97, %p98
      %p100 = scmp.ne.s32.totalorder %s88, %s89
      %p101 = scmp.eq.s32.totalorder %s32, 1
      %p102 = por %p100, %p101
      %p104 = scmp.ne.s32.totalorder %s89, %s103
      %p105 = scmp.eq.s32.totalorder %s32, 0
      %p106 = por %p104, %p105
      %s108 = sadd.s32 %s107, 1
      %p111 = scmp.eq.s32.totalorder %s26, 1
      %p112 = scmp.ne.s32.totalorder %s107, %s109
      %p113 = scmp.eq.s32.totalorder %s26, 0
      %p114 = por %p112, %p113
      %p115 = scmp.ne.s32.totalorder %s107, %s109
      %p116 = scmp.eq.s32.totalorder %s31, 1
      %p117 = por %p115, %p116
      %p118 = scmp.ne.s32.totalorder %s109, %s110
      %p119 = scmp.eq.s32.totalorder %s31, 0
      %p120 = por %p118, %p119
      %p121 = scmp.ne.s32.totalorder %s109, %s110
      %p122 = scmp.eq.s32.totalorder %s32, 1
      %p123 = por %p121, %p122
      %p125 = scmp.ne.s32.totalorder %s110, %s124
      %p126 = scmp.eq.s32.totalorder %s32, 0
      %p127 = por %p125, %p126
      %s129 = sadd.s32 %s128, 1
      %p132 = scmp.eq.s32.totalorder %s26, 1
      %p133 = scmp.ne.s32.totalorder %s128, %s130
      %p134 = scmp.eq.s32.totalorder %s26, 0
      %p135 = por %p133, %p134
      %p136 = scmp.ne.s32.totalorder %s128, %s130
      %p137 = scmp.eq.s32.totalorder %s31, 1
      %p138 = por %p136, %p137
      %p139 = scmp.ne.s32.totalorder %s130, %s131
      %p140 = scmp.eq.s32.totalorder %s31, 0
      %p141 = por %p139, %p140
      %p142 = scmp.ne.s32.totalorder %s130, %s131
      %p143 = scmp.eq.s32.totalorder %s32, 1
      %p144 = por %p142, %p143
      %p146 = scmp.ne.s32.totalorder %s131, %s145
      %p147 = scmp.eq.s32.totalorder %s32, 0
      %p148 = por %p146, %p147
      %s150 = sadd.s32 %s149, 1
      %p153 = scmp.eq.s32.totalorder %s26, 1
      %p154 = scmp.ne.s32.totalorder %s149, %s151
      %p155 = scmp.eq.s32.totalorder %s26, 0
      %p156 = por %p154, %p155
      %p157 = scmp.ne.s32.totalorder %s149, %s151
      %p158 = scmp.eq.s32.totalorder %s31, 1
      %p159 = por %p157, %p158
      %p160 = scmp.ne.s32.totalorder %s151, %s152
      %p161 = scmp.eq.s32.totalorder %s31, 0
      %p162 = por %p160, %p161
      %p163 = scmp.ne.s32.totalorder %s151, %s152
      %p164 = scmp.eq.s32.totalorder %s32, 1
      %p165 = por %p163, %p164
      %p167 = scmp.ne.s32.totalorder %s152, %s166
      %p168 = scmp.eq.s32.totalorder %s32, 0
      %p169 = por %p167, %p168
      %s171 = sadd.s32 %s170, 1
      %p174 = scmp.eq.s32.totalorder %s26, 1
      %p175 = scmp.ne.s32.totalorder %s170, %s172
      %p176 = scmp.eq.s32.totalorder %s26, 0
      %p177 = por %p175, %p176
      %p178 = scmp.ne.s32.totalorder %s170, %s172
      %p179 = scmp.eq.s32.totalorder %s31, 1
      %p180 = por %p178, %p179
      %p181 = scmp.ne.s32.totalorder %s172, %s173
      %p182 = scmp.eq.s32.totalorder %s31, 0
      %p183 = por %p181, %p182
      %p184 = scmp.ne.s32.totalorder %s172, %s173
      %p185 = scmp.eq.s32.totalorder %s32, 1
      %p186 = por %p184, %p185
      %p188 = scmp.ne.s32.totalorder %s173, %s187
      %p189 = scmp.eq.s32.totalorder %s32, 0
      %p190 = por %p188, %p189
      %s192 = sadd.s32 %s191, 1
      %p195 = scmp.eq.s32.totalorder %s26, 1
      %p196 = scmp.ne.s32.totalorder %s191, %s193
      %p197 = scmp.eq.s32.totalorder %s26, 0
      %p198 = por %p196, %p197
      %p199 = scmp.ne.s32.totalorder %s191, %s193
      %p200 = scmp.eq.s32.totalorder %s31, 1
      %p201 = por %p199, %p200
      %p202 = scmp.ne.s32.totalorder %s193, %s194
      %p203 = scmp.eq.s32.totalorder %s31, 0
      %p204 = por %p202, %p203
      %p205 = scmp.ne.s32.totalorder %s193, %s194
      %p206 = scmp.eq.s32.totalorder %s32, 1
      %p207 = por %p205, %p206
      %p209 = scmp.ne.s32.totalorder %s194, %s208
      %p210 = scmp.eq.s32.totalorder %s32, 0
      %p211 = por %p209, %p210
      %s213 = sadd.s32 %s212, 1
      %p216 = scmp.eq.s32.totalorder %s26, 1
      %p217 = scmp.ne.s32.totalorder %s212, %s214
      %p218 = scmp.eq.s32.totalorder %s26, 0
      %p219 = por %p217, %p218
      %p220 = scmp.ne.s32.totalorder %s212, %s214
      %p221 = scmp.eq.s32.totalorder %s31, 1
      %p222 = por %p220, %p221
      %p223 = scmp.ne.s32.totalorder %s214, %s215
      %p224 = scmp.eq.s32.totalorder %s31, 0
      %p225 = por %p223, %p224
      %p226 = scmp.ne.s32.totalorder %s214, %s215
      %p227 = scmp.eq.s32.totalorder %s32, 1
      %p228 = por %p226, %p227
      %p230 = scmp.ne.s32.totalorder %s215, %s229
      %p231 = scmp.eq.s32.totalorder %s32, 0
      %p232 = por %p230, %p231
      %s234 = sadd.s32 %s233, 1
      %p237 = scmp.eq.s32.totalorder %s26, 1
      %p238 = scmp.ne.s32.totalorder %s233, %s235
      %p239 = scmp.eq.s32.totalorder %s26, 0
      %p240 = por %p238, %p239
      %p241 = scmp.ne.s32.totalorder %s233, %s235
      %p242 = scmp.eq.s32.totalorder %s31, 1
      %p243 = por %p241, %p242
      %p244 = scmp.ne.s32.totalorder %s235, %s236
      %p245 = scmp.eq.s32.totalorder %s31, 0
      %p246 = por %p244, %p245
      %p247 = scmp.ne.s32.totalorder %s235, %s236
      %p248 = scmp.eq.s32.totalorder %s32, 1
      %p249 = por %p247, %p248
      %p251 = scmp.ne.s32.totalorder %s236, %s250
      %p252 = scmp.eq.s32.totalorder %s32, 0
      %p253 = por %p251, %p252
      %s255 = sadd.s32 %s254, 1
      %p258 = scmp.eq.s32.totalorder %s26, 1
      %p259 = scmp.ne.s32.totalorder %s254, %s256
      %p260 = scmp.eq.s32.totalorder %s26, 0
      %p261 = por %p259, %p260
      %p262 = scmp.ne.s32.totalorder %s254, %s256
      %p263 = scmp.eq.s32.totalorder %s31, 1
      %p264 = por %p262, %p263
      %p265 = scmp.ne.s32.totalorder %s256, %s257
      %p266 = scmp.eq.s32.totalorder %s31, 0
      %p267 = por %p265, %p266
      %p268 = scmp.ne.s32.totalorder %s256, %s257
      %p269 = scmp.eq.s32.totalorder %s32, 1
      %p270 = por %p268, %p269
      %p272 = scmp.ne.s32.totalorder %s257, %s271
      %p273 = scmp.eq.s32.totalorder %s32, 0
      %p274 = por %p272, %p273
      %s276 = sadd.s32 %s275, 1
      %p279 = scmp.eq.s32.totalorder %s26, 1
      %p280 = scmp.ne.s32.totalorder %s275, %s277
      %p281 = scmp.eq.s32.totalorder %s26, 0
      %p282 = por %p280, %p281
      %p283 = scmp.ne.s32.totalorder %s275, %s277
      %p284 = scmp.eq.s32.totalorder %s31, 1
      %p285 = por %p283, %p284
      %p286 = scmp.ne.s32.totalorder %s277, %s278
      %p287 = scmp.eq.s32.totalorder %s31, 0
      %p288 = por %p286, %p287
      %p289 = scmp.ne.s32.totalorder %s277, %s278
      %p290 = scmp.eq.s32.totalorder %s32, 1
      %p291 = por %p289, %p290
      %p293 = scmp.ne.s32.totalorder %s278, %s292
      %p294 = scmp.eq.s32.totalorder %s32, 0
      %p295 = por %p293, %p294
      %s297 = sadd.s32 %s296, 1
      %p300 = scmp.eq.s32.totalorder %s26, 1
      %p301 = scmp.ne.s32.totalorder %s296, %s298
      %p302 = scmp.eq.s32.totalorder %s26, 0
      %p303 = por %p301, %p302
      %p304 = scmp.ne.s32.totalorder %s296, %s298
      %p305 = scmp.eq.s32.totalorder %s31, 1
      %p306 = por %p304, %p305
      %p307 = scmp.ne.s32.totalorder %s298, %s299
      %p308 = scmp.eq.s32.totalorder %s31, 0
      %p309 = por %p307, %p308
      %p310 = scmp.ne.s32.totalorder %s298, %s299
      %p311 = scmp.eq.s32.totalorder %s32, 1
      %p312 = por %p310, %p311
      %p314 = scmp.ne.s32.totalorder %s299, %s313
      %p315 = scmp.eq.s32.totalorder %s32, 0
      %p316 = por %p314, %p315
      %s318 = sadd.s32 %s317, 1
      %p321 = scmp.eq.s32.totalorder %s26, 1
      %p322 = scmp.ne.s32.totalorder %s317, %s319
      %p323 = scmp.eq.s32.totalorder %s26, 0
      %p324 = por %p322, %p323
      %p325 = scmp.ne.s32.totalorder %s317, %s319
      %p326 = scmp.eq.s32.totalorder %s31, 1
      %p327 = por %p325, %p326
      %p328 = scmp.ne.s32.totalorder %s319, %s320
      %p329 = scmp.eq.s32.totalorder %s31, 0
      %p330 = por %p328, %p329
      %p331 = scmp.ne.s32.totalorder %s319, %s320
      %p332 = scmp.eq.s32.totalorder %s32, 1
      %p333 = por %p331, %p332
      %p335 = scmp.ne.s32.totalorder %s320, %s334
      %p336 = scmp.eq.s32.totalorder %s32, 0
      %p337 = por %p335, %p336
      %s338 = ssub.s32 %s26, %s33
      %p339 = scmp.eq.s32.totalorder %s338, 0
      %s341 = sadd.s32 %s340, 1
      %s342 = scalar_select %p339, %s340, %s341
      %p345 = pneg %p339
      %p346 = scmp.eq.s32.totalorder %s26, 1
      %p347 = por %p345, %p346
      %p348 = scmp.ne.s32.totalorder %s340, %s343
      %p349 = scmp.eq.s32.totalorder %s26, 0
      %p350 = por %p348, %p349
      %p351 = scmp.ne.s32.totalorder %s340, %s343
      %p352 = scmp.eq.s32.totalorder %s31, 1
      %p353 = por %p351, %p352
      %p354 = scmp.ne.s32.totalorder %s343, %s344
      %p355 = scmp.eq.s32.totalorder %s31, 0
      %p356 = por %p354, %p355
      %p357 = scmp.ne.s32.totalorder %s343, %s344
      %p358 = scmp.eq.s32.totalorder %s32, 1
      %p359 = por %p357, %p358
      %p361 = scmp.ne.s32.totalorder %s344, %s360
      %p362 = scmp.eq.s32.totalorder %s32, 0
      %p363 = por %p361, %p362
      %p364 = scmp.le.s32.totalorder 1, %s26
      %p365 = scmp.lt.s32.totalorder %s26, 3
      %p366 = pnand %p364, %p365
      %p367 = pneg %p366
      // Predicated region
      $region9: #{tpu_custom_call.1} parent=5 // pred_check
        _
      $region10: #{tpu_custom_call.1} parent=5 // pred_check_branch
        %369 = sbr.rel (%p366) target = $region12
      $region11: #{tpu_custom_call.1} parent=5 // pred_region
        %s370 = ssub.s32 %s26, 1
        // Predicated region
        $region13: #{tpu_custom_call.1} parent=11 // pred_check
          %p371 = pneg %p99
        $region14: #{tpu_custom_call.1} parent=11 // pred_check_branch
          %373 = sbr.rel (%p371) target = $region16
        $region15: #{tpu_custom_call.1} parent=11 // pred_region
          _
        $region16: #{tpu_custom_call.1} parent=11 // pred_fallthru
          _
        // Predicated region
        $region17: #{tpu_custom_call.1} parent=11 // pred_check
          %p374 = pneg %p120
        $region18: #{tpu_custom_call.1} parent=11 // pred_check_branch
          %376 = sbr.rel (%p374) target = $region20
        $region19: #{tpu_custom_call.1} parent=11 // pred_region
          _
        $region20: #{tpu_custom_call.1} parent=11 // pred_fallthru
          _
        // Predicated region
        $region21: #{tpu_custom_call.1} parent=11 // pred_check
          %p377 = pneg %p141
        $region22: #{tpu_custom_call.1} parent=11 // pred_check_branch
          %379 = sbr.rel (%p377) target = $region24
        $region23: #{tpu_custom_call.1} parent=11 // pred_region
          _
        $region24: #{tpu_custom_call.1} parent=11 // pred_fallthru
          _
        // Predicated region
        $region25: #{tpu_custom_call.1} parent=11 // pred_check
          %p380 = pneg %p162
        $region26: #{tpu_custom_call.1} parent=11 // pred_check_branch
          %382 = sbr.rel (%p380) target = $region28
        $region27: #{tpu_custom_call.1} parent=11 // pred_region
          _
        $region28: #{tpu_custom_call.1} parent=11 // pred_fallthru
          _
        // Predicated region
        $region29: #{tpu_custom_call.1} parent=11 // pred_check
          %p383 = pneg %p183
        $region30: #{tpu_custom_call.1} parent=11 // pred_check_branch
          %385 = sbr.rel (%p383) target = $region32
        $region31: #{tpu_custom_call.1} parent=11 // pred_region
          _
        $region32: #{tpu_custom_call.1} parent=11 // pred_fallthru
          _
        // Predicated region
        $region33: #{tpu_custom_call.1} parent=11 // pred_check
          %p386 = pneg %p204
        $region34: #{tpu_custom_call.1} parent=11 // pred_check_branch
          %388 = sbr.rel (%p386) target = $region36
        $region35: #{tpu_custom_call.1} parent=11 // pred_region
          _
        $region36: #{tpu_custom_call.1} parent=11 // pred_fallthru
          _
        // Predicated region
        $region37: #{tpu_custom_call.1} parent=11 // pred_check
          %p389 = pneg %p225
        $region38: #{tpu_custom_call.1} parent=11 // pred_check_branch
          %391 = sbr.rel (%p389) target = $region40
        $region39: #{tpu_custom_call.1} parent=11 // pred_region
          _
        $region40: #{tpu_custom_call.1} parent=11 // pred_fallthru
          _
        // Predicated region
        $region41: #{tpu_custom_call.1} parent=11 // pred_check
          %p392 = pneg %p246
        $region42: #{tpu_custom_call.1} parent=11 // pred_check_branch
          %394 = sbr.rel (%p392) target = $region44
        $region43: #{tpu_custom_call.1} parent=11 // pred_region
          _
        $region44: #{tpu_custom_call.1} parent=11 // pred_fallthru
          _
        // Predicated region
        $region45: #{tpu_custom_call.1} parent=11 // pred_check
          %p395 = pneg %p267
        $region46: #{tpu_custom_call.1} parent=11 // pred_check_branch
          %397 = sbr.rel (%p395) target = $region48
        $region47: #{tpu_custom_call.1} parent=11 // pred_region
          _
        $region48: #{tpu_custom_call.1} parent=11 // pred_fallthru
          _
        // Predicated region
        $region49: #{tpu_custom_call.1} parent=11 // pred_check
          %p398 = pneg %p288
        $region50: #{tpu_custom_call.1} parent=11 // pred_check_branch
          %400 = sbr.rel (%p398) target = $region52
        $region51: #{tpu_custom_call.1} parent=11 // pred_region
          _
        $region52: #{tpu_custom_call.1} parent=11 // pred_fallthru
          _
        // Predicated region
        $region53: #{tpu_custom_call.1} parent=11 // pred_check
          %p401 = pneg %p309
        $region54: #{tpu_custom_call.1} parent=11 // pred_check_branch
          %403 = sbr.rel (%p401) target = $region56
        $region55: #{tpu_custom_call.1} parent=11 // pred_region
          _
        $region56: #{tpu_custom_call.1} parent=11 // pred_fallthru
          _
        // Predicated region
        $region57: #{tpu_custom_call.1} parent=11 // pred_check
          %p404 = pneg %p330
        $region58: #{tpu_custom_call.1} parent=11 // pred_check_branch
          %406 = sbr.rel (%p404) target = $region60
        $region59: #{tpu_custom_call.1} parent=11 // pred_region
          _
        $region60: #{tpu_custom_call.1} parent=11 // pred_fallthru
          _
      $region12: #{tpu_custom_call.1} parent=5 // pred_fallthru
        _
      %p407 = scmp.lt.s32.totalorder %s26, 2
      // Predicated region
      $region61: #{tpu_custom_call.1} parent=5 // pred_check
        %p408 = pneg %p407
      $region62: #{tpu_custom_call.1} parent=5 // pred_check_branch
        %410 = sbr.rel (%p408) target = $region64
      $region63: #{tpu_custom_call.1} parent=5 // pred_region
        // Predicated region
        $region65: #{tpu_custom_call.1} parent=63 // pred_check
          %p411 = pneg %p46
        $region66: #{tpu_custom_call.1} parent=63 // pred_check_branch
          %413 = sbr.rel (%p411) target = $region68
        $region67: #{tpu_custom_call.1} parent=63 // pred_region
          %s414 = sand.u32 %s36, 1
          %s415 = scalar_lea.sflag [#allocation3], %s414
          %s416 = sand.u32 %s36, 1
          %s417 = smul.addr %s416, 8
          %s418 = scalar_lea.vmem [#allocation2], %s417
          %s420 = ssub.s32 128, 128
          %421 = vsyncadd %s415, %s420
          %s422 = smul.addr %s26, 128
          %s423 = scalar_lea.hbm %s0, %s422
          %s425 = sshll.u32 %s418, 4
          %s426 = int_to_ptr.vmem [resolvable:$true] %s425
          %428 = dma.hbm_to_vmem [thread:$0]  %s423, 128, %s426, %s415
        $region68: #{tpu_custom_call.1} parent=63 // pred_fallthru
          _
        // Predicated region
        $region69: #{tpu_custom_call.1} parent=63 // pred_check
          %p429 = pneg %p72
        $region70: #{tpu_custom_call.1} parent=63 // pred_check_branch
          %431 = sbr.rel (%p429) target = $region72
        $region71: #{tpu_custom_call.1} parent=63 // pred_region
          %p432 = scmp.lt.s32.totalorder %s26, 1
          %s433 = scalar_select %p432, %s26, 1
          %s434 = scalar_lea.vmem %s1, %s433
        $region72: #{tpu_custom_call.1} parent=63 // pred_fallthru
          _
      $region64: #{tpu_custom_call.1} parent=5 // pred_fallthru
        _
      %p435 = scmp.le.s32.totalorder 1, %s26
      %p436 = scmp.lt.s32.totalorder %s26, 3
      %p437 = pnand %p435, %p436
      %p438 = pneg %p437
      // Predicated region
      $region73: #{tpu_custom_call.1} parent=5 // pred_check
        _
      $region74: #{tpu_custom_call.1} parent=5 // pred_check_branch
        %440 = sbr.rel (%p437) target = $region76
      $region75: #{tpu_custom_call.1} parent=5 // pred_region
        %s441 = ssub.s32 %s26, 1
        %s442 = sand.u32 %s39, 1
        %s443 = scalar_lea.sflag [#allocation3], %s442
        %s444 = sand.u32 %s39, 1
        %s445 = smul.addr %s444, 8
        %s446 = scalar_lea.vmem [#allocation2], %s445
        // Predicated region
        $region77: #{tpu_custom_call.1} parent=75 // pred_check
          %p447 = pneg %p52
        $region78: #{tpu_custom_call.1} parent=75 // pred_check_branch
          %449 = sbr.rel (%p447) target = $region80
        $region79: #{tpu_custom_call.1} parent=75 // pred_region
          %450 = dma.done %s443, 128
        $region80: #{tpu_custom_call.1} parent=75 // pred_fallthru
          _
        %s451 = sand.u32 %s39, 1
        %s452 = scalar_lea.sflag [#allocation3], %s451
        %s453 = sand.u32 %s39, 1
        %s454 = smul.addr %s453, 8
        %s455 = scalar_lea.vmem [#allocation2], %s454
        %p456 = pneg %p52
        %p457 = pneg %p49
        %p458 = scmp.lt.s32.totalorder %s31, 1
        %s459 = scalar_select %p458, %s31, 1
        %s460 = scalar_lea.vmem %s1, %s459
        %p461 = pneg %p78
        %p462 = pneg %p75
        %p463 = pneg %p99
        %p464 = pneg %p96
        %p465 = pneg %p120
        %p466 = pneg %p117
        %p467 = pneg %p141
        %p468 = pneg %p138
        %p469 = pneg %p162
        %p470 = pneg %p159
        %p471 = pneg %p183
        %p472 = pneg %p180
        %p473 = pneg %p204
        %p474 = pneg %p201
        %p475 = pneg %p225
        %p476 = pneg %p222
        %p477 = pneg %p246
        %p478 = pneg %p243
        %p479 = pneg %p267
        %p480 = pneg %p264
        %p481 = pneg %p288
        %p482 = pneg %p285
        %p483 = pneg %p309
        %p484 = pneg %p306
        %p485 = pneg %p330
        %p486 = pneg %p327
        %p487 = pneg %p356
        %p488 = pneg %p353
        %s489 = sand.u32 %s343, 1
        %s490 = scalar_lea.sflag [#allocation4], %s489
        %s491 = sand.u32 %s343, 1
        %s492 = smul.addr %s491, 8
        %s493 = scalar_lea.vmem [#allocation5], %s492
        %p494 = scmp.lt.s32.totalorder %s31, 1
        %s495 = scalar_select %p494, %s31, 1
        %s496 = scalar_lea.vmem %s1, %s495
        %v497 = vld [vmem:[%s446] sm:$0xff]
        %v498 = vld [vmem:[%s496] sm:$0x1]
        %vm499 = vcmask 261120
        %v500 = vsel %vm499, %v497, 0.0
        %501 = vadd.xlane.f32.xlu0 %v500
        %v502 = vpop.xlane.xlu0 %501
        %v503 = vrcp.pop 32.0
        %v504 = vmul.f32 %v502, %v503
        %v505 = vsub.f32 %v497, %v504
        %v506 = vmul.f32 %v505, %v505
        %v507 = vsel %vm499, %v506, 0.0
        %508 = vadd.xlane.f32.xlu0 %v507
        %v509 = vpop.xlane.xlu0 %508
        %v510 = vmul.f32 %v509, %v503
        %v511 = vadd.f32 %v510, 1e-05
        %v512 = vrsqrt.pop %v511
        %v513 = vmul.f32 %v505, %v512
        %v514 = vld [vmem:[%s10] sm:$0x1]
        %v516 = vlaneseq
        %v517 = vshrl.u32 %v516, 7
        %v518 = vsub.s32 0, %v517
        %v519 = vrot.slane %v514, %v518
        %v521 = vmul.f32 %v513, %v519
        %v522 = vld [vmem:[%s11] sm:$0x1]
        %v524 = vlaneseq
        %v525 = vshrl.u32 %v524, 7
        %v526 = vsub.s32 0, %v525
        %v527 = vrot.slane %v522, %v526
        %v529 = vadd.f32 %v521, %v527
        %v530 = vld [vmem:[%s2] sm:$0xff]
        %v531 = vld [vmem:[%s2 + $0x8] sm:$0xff]
        %v532 = vld [vmem:[%s2 + $0x10] sm:$0xff]
        %v533 = vld [vmem:[%s2 + $0x18] sm:$0xff]
        %v534 = vld [vmem:[%s3] sm:$0x1]
        %v536 = vlaneseq
        %v537 = vshrl.u32 %v536, 7
        %v538 = vsub.s32 0, %v537
        %v539 = vrot.slane %v534, %v538
        %v542 = vsel %vm499, %v529, 0
        %544 = vmatprep.subr.mxu0 0.0
        %545 = vmatpush1.msra.mxu0 %v530
        %546 = vmatprep.subr.mxu0 0.0
        %547 = vmatpush1.msra.mxu0 %v531
        %548 = vmatprep.subr.mxu0 0.0
        %549 = vmatpush1.msra.mxu0 %v532
        %550 = vmatprep.subr.mxu0 0.0
        %551 = vmatpush1.msra.mxu0 %v533
        %552 = vmatprep.subr.mxu0 0.0
        %553 = vmatpush1.msra.mxu0 0.0
        %554 = vmatprep.subr.mxu0 0.0
        %555 = vmatpush1.msra.mxu0 0.0
        %556 = vmatprep.subr.mxu0 0.0
        %557 = vmatpush1.msra.mxu0 0.0
        %558 = vmatprep.subr.mxu0 0.0
        %559 = vmatpush1.msra.mxu0 0.0
        %560 = vmatprep.subr.mxu0 0.0
        %561 = vmatpush1.msra.mxu0 0.0
        %562 = vmatprep.subr.mxu0 0.0
        %563 = vmatpush1.msra.mxu0 0.0
        %564 = vmatprep.subr.mxu0 0.0
        %565 = vmatpush1.msra.mxu0 0.0
        %566 = vmatprep.subr.mxu0 0.0
        %567 = vmatpush1.msra.mxu0 0.0
        %568 = vmatprep.subr.mxu0 0.0
        %569 = vmatpush1.msra.mxu0 0.0
        %570 = vmatprep.subr.mxu0 0.0
        %571 = vmatpush1.msra.mxu0 0.0
        %572 = vmatprep.subr.mxu0 0.0
        %573 = vmatpush1.msra.mxu0 0.0
        %574 = vmatprep.subr.mxu0 0.0
        %575 = vmatpush1.msra.mxu0 0.0
        %576 = vmatprep.subr.mxu0 0.0
        %577 = vmatpush1.msra.mxu0 0.0
        %578 = vmatprep.subr.mxu0 0.0
        %579 = vmatpush1.msra.mxu0 0.0
        %580 = vmatprep.subr.mxu0 0.0
        %581 = vmatpush1.msra.mxu0 0.0
        %582 = vmatprep.subr.mxu0 0.0
        %583 = vmatpush1.msra.mxu0 0.0
        %584 = vmatprep.subr.mxu0 0.0
        %585 = vmatpush1.msra.mxu0 0.0
        %586 = vmatprep.subr.mxu0 0.0
        %587 = vmatpush1.msra.mxu0 0.0
        %588 = vmatprep.subr.mxu0 0.0
        %589 = vmatpush1.msra.mxu0 0.0
        %590 = vmatprep.subr.mxu0 0.0
        %591 = vmatpush1.msra.mxu0 0.0
        %592 = vmatprep.subr.mxu0 0.0
        %593 = vmatpush1.msra.mxu0 0.0
        %594 = vmatprep.subr.mxu0 0.0
        %595 = vmatpush1.msra.mxu0 0.0
        %596 = vmatprep.subr.mxu0 0.0
        %597 = vmatpush1.msra.mxu0 0.0
        %598 = vmatprep.subr.mxu0 0.0
        %599 = vmatpush1.msra.mxu0 0.0
        %600 = vmatprep.subr.mxu0 0.0
        %601 = vmatpush1.msra.mxu0 0.0
        %602 = vmatprep.subr.mxu0 0.0
        %603 = vmatpush1.msra.mxu0 0.0
        %604 = vmatprep.subr.mxu0 0.0
        %605 = vmatpush1.msra.mxu0 0.0
        %606 = vmatprep.subr.mxu0 0.0
        %607 = vmatpush1.msra.mxu0 0.0
        %608 = vmatprep.mubr.f32.mxu0 0.0
        %609 = vmatmul.mubr.f32.gmra.mrb[0].mxu0 %v542
        %v610 = vpop.f32.mrb[0].mxu0
        %v611 = vadd.f32 %v539, %v610
        %v612 = vpop.f32.mrb[0].mxu0
        %613 = vdwg.mxu0
        %v614 = vld [vmem:[%s4] sm:$0xff]
        %v615 = vld [vmem:[%s4 + $0x8] sm:$0xff]
        %v616 = vld [vmem:[%s4 + $0x10] sm:$0xff]
        %v617 = vld [vmem:[%s4 + $0x18] sm:$0xff]
        %619 = vrot.lane.b32.xlu0 %v611, 96
        %v620 = vpop.permute.xlu0 %619
        %vm621 = vcmask 64512
        %v622 = vsel %vm621, %v611, 0
        %v624 = vsel %vm621, %v620, 0
        %626 = vmatprep.subr.mxu0 0.0
        %627 = vmatpush1.xpose.msra.mxu0 %v624
        %628 = vmatprep.subr.mxu0 0.0
        %629 = vmatpush1.xpose.msra.mxu0 0.0
        %630 = vmatprep.subr.mxu0 0.0
        %631 = vmatpush1.xpose.msra.mxu0 0.0
        %632 = vmatprep.subr.mxu0 0.0
        %633 = vmatpush1.xpose.msra.mxu0 0.0
        %634 = vmatprep.subr.mxu0 0.0
        %635 = vmatpush1.xpose.msra.mxu0 0.0
        %636 = vmatprep.subr.mxu0 0.0
        %637 = vmatpush1.xpose.msra.mxu0 0.0
        %638 = vmatprep.subr.mxu0 0.0
        %639 = vmatpush1.xpose.msra.mxu0 0.0
        %640 = vmatprep.subr.mxu0 0.0
        %641 = vmatpush1.xpose.msra.mxu0 0.0
        %642 = vmatprep.subr.mxu0 0.0
        %643 = vmatpush1.xpose.msra.mxu0 0.0
        %644 = vmatprep.subr.mxu0 0.0
        %645 = vmatpush1.xpose.msra.mxu0 0.0
        %646 = vmatprep.subr.mxu0 0.0
        %647 = vmatpush1.xpose.msra.mxu0 0.0
        %648 = vmatprep.subr.mxu0 0.0
        %649 = vmatpush1.xpose.msra.mxu0 0.0
        %650 = vmatprep.subr.mxu0 0.0
        %651 = vmatpush1.xpose.msra.mxu0 0.0
        %652 = vmatprep.subr.mxu0 0.0
        %653 = vmatpush1.xpose.msra.mxu0 0.0
        %654 = vmatprep.subr.mxu0 0.0
        %655 = vmatpush1.xpose.msra.mxu0 0.0
        %656 = vmatprep.subr.mxu0 0.0
        %657 = vmatpush1.xpose.msra.mxu0 0.0
        %658 = vmatprep.subr.mxu0 0.0
        %659 = vmatpush1.xpose.msra.mxu0 0.0
        %660 = vmatprep.subr.mxu0 0.0
        %661 = vmatpush1.xpose.msra.mxu0 0.0
        %662 = vmatprep.subr.mxu0 0.0
        %663 = vmatpush1.xpose.msra.mxu0 0.0
        %664 = vmatprep.subr.mxu0 0.0
        %665 = vmatpush1.xpose.msra.mxu0 0.0
        %666 = vmatprep.subr.mxu0 0.0
        %667 = vmatpush1.xpose.msra.mxu0 0.0
        %668 = vmatprep.subr.mxu0 0.0
        %669 = vmatpush1.xpose.msra.mxu0 0.0
        %670 = vmatprep.subr.mxu0 0.0
        %671 = vmatpush1.xpose.msra.mxu0 0.0
        %672 = vmatprep.subr.mxu0 0.0
        %673 = vmatpush1.xpose.msra.mxu0 0.0
        %674 = vmatprep.subr.mxu0 0.0
        %675 = vmatpush1.xpose.msra.mxu0 0.0
        %676 = vmatprep.subr.mxu0 0.0
        %677 = vmatpush1.xpose.msra.mxu0 0.0
        %678 = vmatprep.subr.mxu0 0.0
        %679 = vmatpush1.xpose.msra.mxu0 0.0
        %680 = vmatprep.subr.mxu0 0.0
        %681 = vmatpush1.xpose.msra.mxu0 0.0
        %682 = vmatprep.subr.mxu0 0.0
        %683 = vmatpush1.xpose.msra.mxu0 0.0
        %684 = vmatprep.subr.mxu0 0.0
        %685 = vmatpush1.xpose.msra.mxu0 0.0
        %686 = vmatprep.subr.mxu0 0.0
        %687 = vmatpush1.xpose.msra.mxu0 0.0
        %688 = vmatprep.subr.mxu0 0.0
        %689 = vmatpush1.xpose.msra.mxu0 0.0
        %690 = vmatprep.mubr.f32.mxu0 0.0
        %691 = vmatmul.mubr.f32.gmra.mrb[0].mxu0 %v622
        %v692 = vpop.f32.mrb[0].mxu0
        %v693 = vadd.f32 0.0, %v692
        %v694 = vpop.f32.mrb[0].mxu0
        %695 = vdwg.mxu0
        %vm696 = vcmp.eq.f32.partialorder %v498, 0.0
        %v697 = vsel %vm696, 1, 0
        %v698 = vlaneseq
        %v699 = vshrl.u32 %v698, 7
        %v700 = vsub.s32 0, %v699
        %v701 = vrot.slane %v697, %v700
        %vm702 = vcmp.eq.s32.totalorder %v701, 1
        %v703 = vsel %vm702, -1e+09, %v693
        %v704 = vsel %vm621, %v703, -inf
        %705 = vmax.xlane.f32.xlu0 %v704
        %v706 = vpop.xlane.xlu0 %705
        %v707 = vsub.f32 %v703, %v706
        %v708 = vmul.f32 %v707, 1.442695
        %v709 = vpow.pop %v708
        %v710 = vsel %vm621, %v709, 0.0
        %711 = vadd.xlane.f32.xlu0 %v710
        %v712 = vpop.xlane.xlu0 %711
        %v713 = vrcp.pop %v712
        %v714 = vmul.f32 %v709, %v713
        %715 = vrot.lane.b32.xlu0 %v611, 64
        %v716 = vpop.permute.xlu0 %715
        %v719 = vsel %vm621, %v714, 0
        %721 = vmatprep.subr.mxu0 0.0
        %722 = vmatpush1.msra.mxu0 %v716
        %723 = vmatprep.subr.mxu0 0.0
        %724 = vmatpush1.msra.mxu0 0.0
        %725 = vmatprep.subr.mxu0 0.0
        %726 = vmatpush1.msra.mxu0 0.0
        %727 = vmatprep.subr.mxu0 0.0
        %728 = vmatpush1.msra.mxu0 0.0
        %729 = vmatprep.subr.mxu0 0.0
        %730 = vmatpush1.msra.mxu0 0.0
        %731 = vmatprep.subr.mxu0 0.0
        %732 = vmatpush1.msra.mxu0 0.0
        %733 = vmatprep.subr.mxu0 0.0
        %734 = vmatpush1.msra.mxu0 0.0
        %735 = vmatprep.subr.mxu0 0.0
        %736 = vmatpush1.msra.mxu0 0.0
        %737 = vmatprep.subr.mxu0 0.0
        %738 = vmatpush1.msra.mxu0 0.0
        %739 = vmatprep.subr.mxu0 0.0
        %740 = vmatpush1.msra.mxu0 0.0
        %741 = vmatprep.subr.mxu0 0.0
        %742 = vmatpush1.msra.mxu0 0.0
        %743 = vmatprep.subr.mxu0 0.0
        %744 = vmatpush1.msra.mxu0 0.0
        %745 = vmatprep.subr.mxu0 0.0
        %746 = vmatpush1.msra.mxu0 0.0
        %747 = vmatprep.subr.mxu0 0.0
        %748 = vmatpush1.msra.mxu0 0.0
        %749 = vmatprep.subr.mxu0 0.0
        %750 = vmatpush1.msra.mxu0 0.0
        %751 = vmatprep.subr.mxu0 0.0
        %752 = vmatpush1.msra.mxu0 0.0
        %753 = vmatprep.subr.mxu0 0.0
        %754 = vmatpush1.msra.mxu0 0.0
        %755 = vmatprep.subr.mxu0 0.0
        %756 = vmatpush1.msra.mxu0 0.0
        %757 = vmatprep.subr.mxu0 0.0
        %758 = vmatpush1.msra.mxu0 0.0
        %759 = vmatprep.subr.mxu0 0.0
        %760 = vmatpush1.msra.mxu0 0.0
        %761 = vmatprep.subr.mxu0 0.0
        %762 = vmatpush1.msra.mxu0 0.0
        %763 = vmatprep.subr.mxu0 0.0
        %764 = vmatpush1.msra.mxu0 0.0
        %765 = vmatprep.subr.mxu0 0.0
        %766 = vmatpush1.msra.mxu0 0.0
        %767 = vmatprep.subr.mxu0 0.0
        %768 = vmatpush1.msra.mxu0 0.0
        %769 = vmatprep.subr.mxu0 0.0
        %770 = vmatpush1.msra.mxu0 0.0
        %771 = vmatprep.subr.mxu0 0.0
        %772 = vmatpush1.msra.mxu0 0.0
        %773 = vmatprep.subr.mxu0 0.0
        %774 = vmatpush1.msra.mxu0 0.0
        %775 = vmatprep.subr.mxu0 0.0
        %776 = vmatpush1.msra.mxu0 0.0
        %777 = vmatprep.subr.mxu0 0.0
        %778 = vmatpush1.msra.mxu0 0.0
        %779 = vmatprep.subr.mxu0 0.0
        %780 = vmatpush1.msra.mxu0 0.0
        %781 = vmatprep.subr.mxu0 0.0
        %782 = vmatpush1.msra.mxu0 0.0
        %783 = vmatprep.subr.mxu0 0.0
        %784 = vmatpush1.msra.mxu0 0.0
        %785 = vmatprep.mubr.f32.mxu0 0.0
        %786 = vmatmul.mubr.f32.gmra.mrb[0].mxu0 %v719
        %v787 = vpop.f32.mrb[0].mxu0
        %v788 = vadd.f32 0.0, %v787
        %v789 = vpop.f32.mrb[0].mxu0
        %790 = vdwg.mxu0
        %791 = vrot.lane.b32.xlu0 %v611, 120
        %v792 = vpop.permute.xlu0 %791
        %793 = vrot.lane.b32.xlu0 %v611, 88
        %v794 = vpop.permute.xlu0 %793
        %v795 = vsel %vm621, %v792, 0
        %v797 = vsel %vm621, %v794, 0
        %799 = vmatprep.subr.mxu0 0.0
        %800 = vmatpush1.xpose.msra.mxu0 %v797
        %801 = vmatprep.subr.mxu0 0.0
        %802 = vmatpush1.xpose.msra.mxu0 0.0
        %803 = vmatprep.subr.mxu0 0.0
        %804 = vmatpush1.xpose.msra.mxu0 0.0
        %805 = vmatprep.subr.mxu0 0.0
        %806 = vmatpush1.xpose.msra.mxu0 0.0
        %807 = vmatprep.subr.mxu0 0.0
        %808 = vmatpush1.xpose.msra.mxu0 0.0
        %809 = vmatprep.subr.mxu0 0.0
        %810 = vmatpush1.xpose.msra.mxu0 0.0
        %811 = vmatprep.subr.mxu0 0.0
        %812 = vmatpush1.xpose.msra.mxu0 0.0
        %813 = vmatprep.subr.mxu0 0.0
        %814 = vmatpush1.xpose.msra.mxu0 0.0
        %815 = vmatprep.subr.mxu0 0.0
        %816 = vmatpush1.xpose.msra.mxu0 0.0
        %817 = vmatprep.subr.mxu0 0.0
        %818 = vmatpush1.xpose.msra.mxu0 0.0
        %819 = vmatprep.subr.mxu0 0.0
        %820 = vmatpush1.xpose.msra.mxu0 0.0
        %821 = vmatprep.subr.mxu0 0.0
        %822 = vmatpush1.xpose.msra.mxu0 0.0
        %823 = vmatprep.subr.mxu0 0.0
        %824 = vmatpush1.xpose.msra.mxu0 0.0
        %825 = vmatprep.subr.mxu0 0.0
        %826 = vmatpush1.xpose.msra.mxu0 0.0
        %827 = vmatprep.subr.mxu0 0.0
        %828 = vmatpush1.xpose.msra.mxu0 0.0
        %829 = vmatprep.subr.mxu0 0.0
        %830 = vmatpush1.xpose.msra.mxu0 0.0
        %831 = vmatprep.subr.mxu0 0.0
        %832 = vmatpush1.xpose.msra.mxu0 0.0
        %833 = vmatprep.subr.mxu0 0.0
        %834 = vmatpush1.xpose.msra.mxu0 0.0
        %835 = vmatprep.subr.mxu0 0.0
        %836 = vmatpush1.xpose.msra.mxu0 0.0
        %837 = vmatprep.subr.mxu0 0.0
        %838 = vmatpush1.xpose.msra.mxu0 0.0
        %839 = vmatprep.subr.mxu0 0.0
        %840 = vmatpush1.xpose.msra.mxu0 0.0
        %841 = vmatprep.subr.mxu0 0.0
        %842 = vmatpush1.xpose.msra.mxu0 0.0
        %843 = vmatprep.subr.mxu0 0.0
        %844 = vmatpush1.xpose.msra.mxu0 0.0
        %845 = vmatprep.subr.mxu0 0.0
        %846 = vmatpush1.xpose.msra.mxu0 0.0
        %847 = vmatprep.subr.mxu0 0.0
        %848 = vmatpush1.xpose.msra.mxu0 0.0
        %849 = vmatprep.subr.mxu0 0.0
        %850 = vmatpush1.xpose.msra.mxu0 0.0
        %851 = vmatprep.subr.mxu0 0.0
        %852 = vmatpush1.xpose.msra.mxu0 0.0
        %853 = vmatprep.subr.mxu0 0.0
        %854 = vmatpush1.xpose.msra.mxu0 0.0
        %855 = vmatprep.subr.mxu0 0.0
        %856 = vmatpush1.xpose.msra.mxu0 0.0
        %857 = vmatprep.subr.mxu0 0.0
        %858 = vmatpush1.xpose.msra.mxu0 0.0
        %859 = vmatprep.subr.mxu0 0.0
        %860 = vmatpush1.xpose.msra.mxu0 0.0
        %861 = vmatprep.subr.mxu0 0.0
        %862 = vmatpush1.xpose.msra.mxu0 0.0
        %863 = vmatprep.mubr.f32.mxu0 0.0
        %864 = vmatmul.mubr.f32.gmra.mrb[0].mxu0 %v795
        %v865 = vpop.f32.mrb[0].mxu0
        %v866 = vadd.f32 0.0, %v865
        %v867 = vpop.f32.mrb[0].mxu0
        %868 = vdwg.mxu0
        %v869 = vsel %vm702, -1e+09, %v866
        %v870 = vsel %vm621, %v869, -inf
        %871 = vmax.xlane.f32.xlu0 %v870
        %v872 = vpop.xlane.xlu0 %871
        %v873 = vsub.f32 %v869, %v872
        %v874 = vmul.f32 %v873, 1.442695
        %v875 = vpow.pop %v874
        %v876 = vsel %vm621, %v875, 0.0
        %877 = vadd.xlane.f32.xlu0 %v876
        %v878 = vpop.xlane.xlu0 %877
        %v879 = vrcp.pop %v878
        %v880 = vmul.f32 %v875, %v879
        %881 = vrot.lane.b32.xlu0 %v611, 56
        %v882 = vpop.permute.xlu0 %881
        %v885 = vsel %vm621, %v880, 0
        %887 = vmatprep.subr.mxu0 0.0
        %888 = vmatpush1.msra.mxu0 %v882
        %889 = vmatprep.subr.mxu0 0.0
        %890 = vmatpush1.msra.mxu0 0.0
        %891 = vmatprep.subr.mxu0 0.0
        %892 = vmatpush1.msra.mxu0 0.0
        %893 = vmatprep.subr.mxu0 0.0
        %894 = vmatpush1.msra.mxu0 0.0
        %895 = vmatprep.subr.mxu0 0.0
        %896 = vmatpush1.msra.mxu0 0.0
        %897 = vmatprep.subr.mxu0 0.0
        %898 = vmatpush1.msra.mxu0 0.0
        %899 = vmatprep.subr.mxu0 0.0
        %900 = vmatpush1.msra.mxu0 0.0
        %901 = vmatprep.subr.mxu0 0.0
        %902 = vmatpush1.msra.mxu0 0.0
        %903 = vmatprep.subr.mxu0 0.0
        %904 = vmatpush1.msra.mxu0 0.0
        %905 = vmatprep.subr.mxu0 0.0
        %906 = vmatpush1.msra.mxu0 0.0
        %907 = vmatprep.subr.mxu0 0.0
        %908 = vmatpush1.msra.mxu0 0.0
        %909 = vmatprep.subr.mxu0 0.0
        %910 = vmatpush1.msra.mxu0 0.0
        %911 = vmatprep.subr.mxu0 0.0
        %912 = vmatpush1.msra.mxu0 0.0
        %913 = vmatprep.subr.mxu0 0.0
        %914 = vmatpush1.msra.mxu0 0.0
        %915 = vmatprep.subr.mxu0 0.0
        %916 = vmatpush1.msra.mxu0 0.0
        %917 = vmatprep.subr.mxu0 0.0
        %918 = vmatpush1.msra.mxu0 0.0
        %919 = vmatprep.subr.mxu0 0.0
        %920 = vmatpush1.msra.mxu0 0.0
        %921 = vmatprep.subr.mxu0 0.0
        %922 = vmatpush1.msra.mxu0 0.0
        %923 = vmatprep.subr.mxu0 0.0
        %924 = vmatpush1.msra.mxu0 0.0
        %925 = vmatprep.subr.mxu0 0.0
        %926 = vmatpush1.msra.mxu0 0.0
        %927 = vmatprep.subr.mxu0 0.0
        %928 = vmatpush1.msra.mxu0 0.0
        %929 = vmatprep.subr.mxu0 0.0
        %930 = vmatpush1.msra.mxu0 0.0
        %931 = vmatprep.subr.mxu0 0.0
        %932 = vmatpush1.msra.mxu0 0.0
        %933 = vmatprep.subr.mxu0 0.0
        %934 = vmatpush1.msra.mxu0 0.0
        %935 = vmatprep.subr.mxu0 0.0
        %936 = vmatpush1.msra.mxu0 0.0
        %937 = vmatprep.subr.mxu0 0.0
        %938 = vmatpush1.msra.mxu0 0.0
        %939 = vmatprep.subr.mxu0 0.0
        %940 = vmatpush1.msra.mxu0 0.0
        %941 = vmatprep.subr.mxu0 0.0
        %942 = vmatpush1.msra.mxu0 0.0
        %943 = vmatprep.subr.mxu0 0.0
        %944 = vmatpush1.msra.mxu0 0.0
        %945 = vmatprep.subr.mxu0 0.0
        %946 = vmatpush1.msra.mxu0 0.0
        %947 = vmatprep.subr.mxu0 0.0
        %948 = vmatpush1.msra.mxu0 0.0
        %949 = vmatprep.subr.mxu0 0.0
        %950 = vmatpush1.msra.mxu0 0.0
        %951 = vmatprep.mubr.f32.mxu0 0.0
        %952 = vmatmul.mubr.f32.gmra.mrb[0].mxu0 %v885
        %v953 = vpop.f32.mrb[0].mxu0
        %v954 = vadd.f32 0.0, %v953
        %v955 = vpop.f32.mrb[0].mxu0
        %956 = vdwg.mxu0
        %v958 = vsel %vm621, %v954, 0
        %960 = vmatprep.subr.mxu0 0.0
        %961 = vmatpush1.msra.mxu0 %v615
        %962 = vmatprep.subr.mxu0 0.0
        %963 = vmatpush1.msra.mxu0 0.0
        %964 = vmatprep.subr.mxu0 0.0
        %965 = vmatpush1.msra.mxu0 0.0
        %966 = vmatprep.subr.mxu0 0.0
        %967 = vmatpush1.msra.mxu0 0.0
        %968 = vmatprep.subr.mxu0 0.0
        %969 = vmatpush1.msra.mxu0 0.0
        %970 = vmatprep.subr.mxu0 0.0
        %971 = vmatpush1.msra.mxu0 0.0
        %972 = vmatprep.subr.mxu0 0.0
        %973 = vmatpush1.msra.mxu0 0.0
        %974 = vmatprep.subr.mxu0 0.0
        %975 = vmatpush1.msra.mxu0 0.0
        %976 = vmatprep.subr.mxu0 0.0
        %977 = vmatpush1.msra.mxu0 0.0
        %978 = vmatprep.subr.mxu0 0.0
        %979 = vmatpush1.msra.mxu0 0.0
        %980 = vmatprep.subr.mxu0 0.0
        %981 = vmatpush1.msra.mxu0 0.0
        %982 = vmatprep.subr.mxu0 0.0
        %983 = vmatpush1.msra.mxu0 0.0
        %984 = vmatprep.subr.mxu0 0.0
        %985 = vmatpush1.msra.mxu0 0.0
        %986 = vmatprep.subr.mxu0 0.0
        %987 = vmatpush1.msra.mxu0 0.0
        %988 = vmatprep.subr.mxu0 0.0
        %989 = vmatpush1.msra.mxu0 0.0
        %990 = vmatprep.subr.mxu0 0.0
        %991 = vmatpush1.msra.mxu0 0.0
        %992 = vmatprep.subr.mxu0 0.0
        %993 = vmatpush1.msra.mxu0 0.0
        %994 = vmatprep.subr.mxu0 0.0
        %995 = vmatpush1.msra.mxu0 0.0
        %996 = vmatprep.subr.mxu0 0.0
        %997 = vmatpush1.msra.mxu0 0.0
        %998 = vmatprep.subr.mxu0 0.0
        %999 = vmatpush1.msra.mxu0 0.0
        %1000 = vmatprep.subr.mxu0 0.0
        %1001 = vmatpush1.msra.mxu0 0.0
        %1002 = vmatprep.subr.mxu0 0.0
        %1003 = vmatpush1.msra.mxu0 0.0
        %1004 = vmatprep.subr.mxu0 0.0
        %1005 = vmatpush1.msra.mxu0 0.0
        %1006 = vmatprep.subr.mxu0 0.0
        %1007 = vmatpush1.msra.mxu0 0.0
        %1008 = vmatprep.subr.mxu0 0.0
        %1009 = vmatpush1.msra.mxu0 0.0
        %1010 = vmatprep.subr.mxu0 0.0
        %1011 = vmatpush1.msra.mxu0 0.0
        %1012 = vmatprep.subr.mxu0 0.0
        %1013 = vmatpush1.msra.mxu0 0.0
        %1014 = vmatprep.subr.mxu0 0.0
        %1015 = vmatpush1.msra.mxu0 0.0
        %1016 = vmatprep.subr.mxu0 0.0
        %1017 = vmatpush1.msra.mxu0 0.0
        %1018 = vmatprep.subr.mxu0 0.0
        %1019 = vmatpush1.msra.mxu0 0.0
        %1020 = vmatprep.subr.mxu0 0.0
        %1021 = vmatpush1.msra.mxu0 0.0
        %1022 = vmatprep.subr.mxu0 0.0
        %1023 = vmatpush1.msra.mxu0 0.0
        %1024 = vmatprep.mubr.f32.mxu0 0.0
        %1025 = vmatmul.mubr.f32.gmra.mrb[0].mxu0 %v958
        %v1026 = vpop.f32.mrb[0].mxu0
        %v1027 = vadd.f32 0.0, %v1026
        %v1028 = vpop.f32.mrb[0].mxu0
        %1029 = vdwg.mxu0
        %v1031 = vsel %vm621, %v788, 0
        %1033 = vmatprep.subr.mxu0 0.0
        %1034 = vmatpush1.msra.mxu0 %v614
        %1035 = vmatprep.subr.mxu0 0.0
        %1036 = vmatpush1.msra.mxu0 0.0
        %1037 = vmatprep.subr.mxu0 0.0
        %1038 = vmatpush1.msra.mxu0 0.0
        %1039 = vmatprep.subr.mxu0 0.0
        %1040 = vmatpush1.msra.mxu0 0.0
        %1041 = vmatprep.subr.mxu0 0.0
        %1042 = vmatpush1.msra.mxu0 0.0
        %1043 = vmatprep.subr.mxu0 0.0
        %1044 = vmatpush1.msra.mxu0 0.0
        %1045 = vmatprep.subr.mxu0 0.0
        %1046 = vmatpush1.msra.mxu0 0.0
        %1047 = vmatprep.subr.mxu0 0.0
        %1048 = vmatpush1.msra.mxu0 0.0
        %1049 = vmatprep.subr.mxu0 0.0
        %1050 = vmatpush1.msra.mxu0 0.0
        %1051 = vmatprep.subr.mxu0 0.0
        %1052 = vmatpush1.msra.mxu0 0.0
        %1053 = vmatprep.subr.mxu0 0.0
        %1054 = vmatpush1.msra.mxu0 0.0
        %1055 = vmatprep.subr.mxu0 0.0
        %1056 = vmatpush1.msra.mxu0 0.0
        %1057 = vmatprep.subr.mxu0 0.0
        %1058 = vmatpush1.msra.mxu0 0.0
        %1059 = vmatprep.subr.mxu0 0.0
        %1060 = vmatpush1.msra.mxu0 0.0
        %1061 = vmatprep.subr.mxu0 0.0
        %1062 = vmatpush1.msra.mxu0 0.0
        %1063 = vmatprep.subr.mxu0 0.0
        %1064 = vmatpush1.msra.mxu0 0.0
        %1065 = vmatprep.subr.mxu0 0.0
        %1066 = vmatpush1.msra.mxu0 0.0
        %1067 = vmatprep.subr.mxu0 0.0
        %1068 = vmatpush1.msra.mxu0 0.0
        %1069 = vmatprep.subr.mxu0 0.0
        %1070 = vmatpush1.msra.mxu0 0.0
        %1071 = vmatprep.subr.mxu0 0.0
        %1072 = vmatpush1.msra.mxu0 0.0
        %1073 = vmatprep.subr.mxu0 0.0
        %1074 = vmatpush1.msra.mxu0 0.0
        %1075 = vmatprep.subr.mxu0 0.0
        %1076 = vmatpush1.msra.mxu0 0.0
        %1077 = vmatprep.subr.mxu0 0.0
        %1078 = vmatpush1.msra.mxu0 0.0
        %1079 = vmatprep.subr.mxu0 0.0
        %1080 = vmatpush1.msra.mxu0 0.0
        %1081 = vmatprep.subr.mxu0 0.0
        %1082 = vmatpush1.msra.mxu0 0.0
        %1083 = vmatprep.subr.mxu0 0.0
        %1084 = vmatpush1.msra.mxu0 0.0
        %1085 = vmatprep.subr.mxu0 0.0
        %1086 = vmatpush1.msra.mxu0 0.0
        %1087 = vmatprep.subr.mxu0 0.0
        %1088 = vmatpush1.msra.mxu0 0.0
        %1089 = vmatprep.subr.mxu0 0.0
        %1090 = vmatpush1.msra.mxu0 0.0
        %1091 = vmatprep.subr.mxu0 0.0
        %1092 = vmatpush1.msra.mxu0 0.0
        %1093 = vmatprep.subr.mxu0 0.0
        %1094 = vmatpush1.msra.mxu0 0.0
        %1095 = vmatprep.subr.mxu0 0.0
        %1096 = vmatpush1.msra.mxu0 0.0
        %1097 = vmatprep.mubr.f32.mxu0 0.0
        %1098 = vmatmul.mubr.f32.gmra.mrb[0].mxu0 %v1031
        %v1099 = vpop.f32.mrb[0].mxu0
        %v1100 = vadd.f32 %v1027, %v1099
        %v1101 = vpop.f32.mrb[0].mxu0
        %1102 = vdwg.mxu0
        %1103 = vrot.lane.b32.xlu0 %v611, 112
        %v1104 = vpop.permute.xlu0 %1103
        %1105 = vrot.lane.b32.xlu0 %v611, 80
        %v1106 = vpop.permute.xlu0 %1105
        %v1107 = vsel %vm621, %v1104, 0
        %v1109 = vsel %vm621, %v1106, 0
        %1111 = vmatprep.subr.mxu0 0.0
        %1112 = vmatpush1.xpose.msra.mxu0 %v1109
        %1113 = vmatprep.subr.mxu0 0.0
        %1114 = vmatpush1.xpose.msra.mxu0 0.0
        %1115 = vmatprep.subr.mxu0 0.0
        %1116 = vmatpush1.xpose.msra.mxu0 0.0
        %1117 = vmatprep.subr.mxu0 0.0
        %1118 = vmatpush1.xpose.msra.mxu0 0.0
        %1119 = vmatprep.subr.mxu0 0.0
        %1120 = vmatpush1.xpose.msra.mxu0 0.0
        %1121 = vmatprep.subr.mxu0 0.0
        %1122 = vmatpush1.xpose.msra.mxu0 0.0
        %1123 = vmatprep.subr.mxu0 0.0
        %1124 = vmatpush1.xpose.msra.mxu0 0.0
        %1125 = vmatprep.subr.mxu0 0.0
        %1126 = vmatpush1.xpose.msra.mxu0 0.0
        %1127 = vmatprep.subr.mxu0 0.0
        %1128 = vmatpush1.xpose.msra.mxu0 0.0
        %1129 = vmatprep.subr.mxu0 0.0
        %1130 = vmatpush1.xpose.msra.mxu0 0.0
        %1131 = vmatprep.subr.mxu0 0.0
        %1132 = vmatpush1.xpose.msra.mxu0 0.0
        %1133 = vmatprep.subr.mxu0 0.0
        %1134 = vmatpush1.xpose.msra.mxu0 0.0
        %1135 = vmatprep.subr.mxu0 0.0
        %1136 = vmatpush1.xpose.msra.mxu0 0.0
        %1137 = vmatprep.subr.mxu0 0.0
        %1138 = vmatpush1.xpose.msra.mxu0 0.0
        %1139 = vmatprep.subr.mxu0 0.0
        %1140 = vmatpush1.xpose.msra.mxu0 0.0
        %1141 = vmatprep.subr.mxu0 0.0
        %1142 = vmatpush1.xpose.msra.mxu0 0.0
        %1143 = vmatprep.subr.mxu0 0.0
        %1144 = vmatpush1.xpose.msra.mxu0 0.0
        %1145 = vmatprep.subr.mxu0 0.0
        %1146 = vmatpush1.xpose.msra.mxu0 0.0
        %1147 = vmatprep.subr.mxu0 0.0
        %1148 = vmatpush1.xpose.msra.mxu0 0.0
        %1149 = vmatprep.subr.mxu0 0.0
        %1150 = vmatpush1.xpose.msra.mxu0 0.0
        %1151 = vmatprep.subr.mxu0 0.0
        %1152 = vmatpush1.xpose.msra.mxu0 0.0
        %1153 = vmatprep.subr.mxu0 0.0
        %1154 = vmatpush1.xpose.msra.mxu0 0.0
        %1155 = vmatprep.subr.mxu0 0.0
        %1156 = vmatpush1.xpose.msra.mxu0 0.0
        %1157 = vmatprep.subr.mxu0 0.0
        %1158 = vmatpush1.xpose.msra.mxu0 0.0
        %1159 = vmatprep.subr.mxu0 0.0
        %1160 = vmatpush1.xpose.msra.mxu0 0.0
        %1161 = vmatprep.subr.mxu0 0.0
        %1162 = vmatpush1.xpose.msra.mxu0 0.0
        %1163 = vmatprep.subr.mxu0 0.0
        %1164 = vmatpush1.xpose.msra.mxu0 0.0
        %1165 = vmatprep.subr.mxu0 0.0
        %1166 = vmatpush1.xpose.msra.mxu0 0.0
        %1167 = vmatprep.subr.mxu0 0.0
        %1168 = vmatpush1.xpose.msra.mxu0 0.0
        %1169 = vmatprep.subr.mxu0 0.0
        %1170 = vmatpush1.xpose.msra.mxu0 0.0
        %1171 = vmatprep.subr.mxu0 0.0
        %1172 = vmatpush1.xpose.msra.mxu0 0.0
        %1173 = vmatprep.subr.mxu0 0.0
        %1174 = vmatpush1.xpose.msra.mxu0 0.0
        %1175 = vmatprep.mubr.f32.mxu0 0.0
        %1176 = vmatmul.mubr.f32.gmra.mrb[0].mxu0 %v1107
        %v1177 = vpop.f32.mrb[0].mxu0
        %v1178 = vadd.f32 0.0, %v1177
        %v1179 = vpop.f32.mrb[0].mxu0
        %1180 = vdwg.mxu0
        %v1181 = vsel %vm702, -1e+09, %v1178
        %v1182 = vsel %vm621, %v1181, -inf
        %1183 = vmax.xlane.f32.xlu0 %v1182
        %v1184 = vpop.xlane.xlu0 %1183
        %v1185 = vsub.f32 %v1181, %v1184
        %v1186 = vmul.f32 %v1185, 1.442695
        %v1187 = vpow.pop %v1186
        %v1188 = vsel %vm621, %v1187, 0.0
        %1189 = vadd.xlane.f32.xlu0 %v1188
        %v1190 = vpop.xlane.xlu0 %1189
        %v1191 = vrcp.pop %v1190
        %v1192 = vmul.f32 %v1187, %v1191
        %1193 = vrot.lane.b32.xlu0 %v611, 48
        %v1194 = vpop.permute.xlu0 %1193
        %v1197 = vsel %vm621, %v1192, 0
        %1199 = vmatprep.subr.mxu0 0.0
        %1200 = vmatpush1.msra.mxu0 %v1194
        %1201 = vmatprep.subr.mxu0 0.0
        %1202 = vmatpush1.msra.mxu0 0.0
        %1203 = vmatprep.subr.mxu0 0.0
        %1204 = vmatpush1.msra.mxu0 0.0
        %1205 = vmatprep.subr.mxu0 0.0
        %1206 = vmatpush1.msra.mxu0 0.0
        %1207 = vmatprep.subr.mxu0 0.0
        %1208 = vmatpush1.msra.mxu0 0.0
        %1209 = vmatprep.subr.mxu0 0.0
        %1210 = vmatpush1.msra.mxu0 0.0
        %1211 = vmatprep.subr.mxu0 0.0
        %1212 = vmatpush1.msra.mxu0 0.0
        %1213 = vmatprep.subr.mxu0 0.0
        %1214 = vmatpush1.msra.mxu0 0.0
        %1215 = vmatprep.subr.mxu0 0.0
        %1216 = vmatpush1.msra.mxu0 0.0
        %1217 = vmatprep.subr.mxu0 0.0
        %1218 = vmatpush1.msra.mxu0 0.0
        %1219 = vmatprep.subr.mxu0 0.0
        %1220 = vmatpush1.msra.mxu0 0.0
        %1221 = vmatprep.subr.mxu0 0.0
        %1222 = vmatpush1.msra.mxu0 0.0
        %1223 = vmatprep.subr.mxu0 0.0
        %1224 = vmatpush1.msra.mxu0 0.0
        %1225 = vmatprep.subr.mxu0 0.0
        %1226 = vmatpush1.msra.mxu0 0.0
        %1227 = vmatprep.subr.mxu0 0.0
        %1228 = vmatpush1.msra.mxu0 0.0
        %1229 = vmatprep.subr.mxu0 0.0
        %1230 = vmatpush1.msra.mxu0 0.0
        %1231 = vmatprep.subr.mxu0 0.0
        %1232 = vmatpush1.msra.mxu0 0.0
        %1233 = vmatprep.subr.mxu0 0.0
        %1234 = vmatpush1.msra.mxu0 0.0
        %1235 = vmatprep.subr.mxu0 0.0
        %1236 = vmatpush1.msra.mxu0 0.0
        %1237 = vmatprep.subr.mxu0 0.0
        %1238 = vmatpush1.msra.mxu0 0.0
        %1239 = vmatprep.subr.mxu0 0.0
        %1240 = vmatpush1.msra.mxu0 0.0
        %1241 = vmatprep.subr.mxu0 0.0
        %1242 = vmatpush1.msra.mxu0 0.0
        %1243 = vmatprep.subr.mxu0 0.0
        %1244 = vmatpush1.msra.mxu0 0.0
        %1245 = vmatprep.subr.mxu0 0.0
        %1246 = vmatpush1.msra.mxu0 0.0
        %1247 = vmatprep.subr.mxu0 0.0
        %1248 = vmatpush1.msra.mxu0 0.0
        %1249 = vmatprep.subr.mxu0 0.0
        %1250 = vmatpush1.msra.mxu0 0.0
        %1251 = vmatprep.subr.mxu0 0.0
        %1252 = vmatpush1.msra.mxu0 0.0
        %1253 = vmatprep.subr.mxu0 0.0
        %1254 = vmatpush1.msra.mxu0 0.0
        %1255 = vmatprep.subr.mxu0 0.0
        %1256 = vmatpush1.msra.mxu0 0.0
        %1257 = vmatprep.subr.mxu0 0.0
        %1258 = vmatpush1.msra.mxu0 0.0
        %1259 = vmatprep.subr.mxu0 0.0
        %1260 = vmatpush1.msra.mxu0 0.0
        %1261 = vmatprep.subr.mxu0 0.0
        %1262 = vmatpush1.msra.mxu0 0.0
        %1263 = vmatprep.mubr.f32.mxu0 0.0
        %1264 = vmatmul.mubr.f32.gmra.mrb[0].mxu0 %v1197
        %v1265 = vpop.f32.mrb[0].mxu0
        %v1266 = vadd.f32 0.0, %v1265
        %v1267 = vpop.f32.mrb[0].mxu0
        %1268 = vdwg.mxu0
        %v1270 = vsel %vm621, %v1266, 0
        %1272 = vmatprep.subr.mxu0 0.0
        %1273 = vmatpush1.msra.mxu0 %v616
        %1274 = vmatprep.subr.mxu0 0.0
        %1275 = vmatpush1.msra.mxu0 0.0
        %1276 = vmatprep.subr.mxu0 0.0
        %1277 = vmatpush1.msra.mxu0 0.0
        %1278 = vmatprep.subr.mxu0 0.0
        %1279 = vmatpush1.msra.mxu0 0.0
        %1280 = vmatprep.subr.mxu0 0.0
        %1281 = vmatpush1.msra.mxu0 0.0
        %1282 = vmatprep.subr.mxu0 0.0
        %1283 = vmatpush1.msra.mxu0 0.0
        %1284 = vmatprep.subr.mxu0 0.0
        %1285 = vmatpush1.msra.mxu0 0.0
        %1286 = vmatprep.subr.mxu0 0.0
        %1287 = vmatpush1.msra.mxu0 0.0
        %1288 = vmatprep.subr.mxu0 0.0
        %1289 = vmatpush1.msra.mxu0 0.0
        %1290 = vmatprep.subr.mxu0 0.0
        %1291 = vmatpush1.msra.mxu0 0.0
        %1292 = vmatprep.subr.mxu0 0.0
        %1293 = vmatpush1.msra.mxu0 0.0
        %1294 = vmatprep.subr.mxu0 0.0
        %1295 = vmatpush1.msra.mxu0 0.0
        %1296 = vmatprep.subr.mxu0 0.0
        %1297 = vmatpush1.msra.mxu0 0.0
        %1298 = vmatprep.subr.mxu0 0.0
        %1299 = vmatpush1.msra.mxu0 0.0
        %1300 = vmatprep.subr.mxu0 0.0
        %1301 = vmatpush1.msra.mxu0 0.0
        %1302 = vmatprep.subr.mxu0 0.0
        %1303 = vmatpush1.msra.mxu0 0.0
        %1304 = vmatprep.subr.mxu0 0.0
        %1305 = vmatpush1.msra.mxu0 0.0
        %1306 = vmatprep.subr.mxu0 0.0
        %1307 = vmatpush1.msra.mxu0 0.0
        %1308 = vmatprep.subr.mxu0 0.0
        %1309 = vmatpush1.msra.mxu0 0.0
        %1310 = vmatprep.subr.mxu0 0.0
        %1311 = vmatpush1.msra.mxu0 0.0
        %1312 = vmatprep.subr.mxu0 0.0
        %1313 = vmatpush1.msra.mxu0 0.0
        %1314 = vmatprep.subr.mxu0 0.0
        %1315 = vmatpush1.msra.mxu0 0.0
        %1316 = vmatprep.subr.mxu0 0.0
        %1317 = vmatpush1.msra.mxu0 0.0
        %1318 = vmatprep.subr.mxu0 0.0
        %1319 = vmatpush1.msra.mxu0 0.0
        %1320 = vmatprep.subr.mxu0 0.0
        %1321 = vmatpush1.msra.mxu0 0.0
        %1322 = vmatprep.subr.mxu0 0.0
        %1323 = vmatpush1.msra.mxu0 0.0
        %1324 = vmatprep.subr.mxu0 0.0
        %1325 = vmatpush1.msra.mxu0 0.0
        %1326 = vmatprep.subr.mxu0 0.0
        %1327 = vmatpush1.msra.mxu0 0.0
        %1328 = vmatprep.subr.mxu0 0.0
        %1329 = vmatpush1.msra.mxu0 0.0
        %1330 = vmatprep.subr.mxu0 0.0
        %1331 = vmatpush1.msra.mxu0 0.0
        %1332 = vmatprep.subr.mxu0 0.0
        %1333 = vmatpush1.msra.mxu0 0.0
        %1334 = vmatprep.subr.mxu0 0.0
        %1335 = vmatpush1.msra.mxu0 0.0
        %1336 = vmatprep.mubr.f32.mxu0 0.0
        %1337 = vmatmul.mubr.f32.gmra.mrb[0].mxu0 %v1270
        %v1338 = vpop.f32.mrb[0].mxu0
        %v1339 = vadd.f32 0.0, %v1338
        %v1340 = vpop.f32.mrb[0].mxu0
        %1341 = vdwg.mxu0
        %v1342 = vadd.f32 %v1100, %v1339
        %1343 = vrot.lane.b32.xlu0 %v611, 104
        %v1344 = vpop.permute.xlu0 %1343
        %1345 = vrot.lane.b32.xlu0 %v611, 72
        %v1346 = vpop.permute.xlu0 %1345
        %v1347 = vsel %vm621, %v1344, 0
        %v1349 = vsel %vm621, %v1346, 0
        %1351 = vmatprep.subr.mxu0 0.0
        %1352 = vmatpush1.xpose.msra.mxu0 %v1349
        %1353 = vmatprep.subr.mxu0 0.0
        %1354 = vmatpush1.xpose.msra.mxu0 0.0
        %1355 = vmatprep.subr.mxu0 0.0
        %1356 = vmatpush1.xpose.msra.mxu0 0.0
        %1357 = vmatprep.subr.mxu0 0.0
        %1358 = vmatpush1.xpose.msra.mxu0 0.0
        %1359 = vmatprep.subr.mxu0 0.0
        %1360 = vmatpush1.xpose.msra.mxu0 0.0
        %1361 = vmatprep.subr.mxu0 0.0
        %1362 = vmatpush1.xpose.msra.mxu0 0.0
        %1363 = vmatprep.subr.mxu0 0.0
        %1364 = vmatpush1.xpose.msra.mxu0 0.0
        %1365 = vmatprep.subr.mxu0 0.0
        %1366 = vmatpush1.xpose.msra.mxu0 0.0
        %1367 = vmatprep.subr.mxu0 0.0
        %1368 = vmatpush1.xpose.msra.mxu0 0.0
        %1369 = vmatprep.subr.mxu0 0.0
        %1370 = vmatpush1.xpose.msra.mxu0 0.0
        %1371 = vmatprep.subr.mxu0 0.0
        %1372 = vmatpush1.xpose.msra.mxu0 0.0
        %1373 = vmatprep.subr.mxu0 0.0
        %1374 = vmatpush1.xpose.msra.mxu0 0.0
        %1375 = vmatprep.subr.mxu0 0.0
        %1376 = vmatpush1.xpose.msra.mxu0 0.0
        %1377 = vmatprep.subr.mxu0 0.0
        %1378 = vmatpush1.xpose.msra.mxu0 0.0
        %1379 = vmatprep.subr.mxu0 0.0
        %1380 = vmatpush1.xpose.msra.mxu0 0.0
        %1381 = vmatprep.subr.mxu0 0.0
        %1382 = vmatpush1.xpose.msra.mxu0 0.0
        %1383 = vmatprep.subr.mxu0 0.0
        %1384 = vmatpush1.xpose.msra.mxu0 0.0
        %1385 = vmatprep.subr.mxu0 0.0
        %1386 = vmatpush1.xpose.msra.mxu0 0.0
        %1387 = vmatprep.subr.mxu0 0.0
        %1388 = vmatpush1.xpose.msra.mxu0 0.0
        %1389 = vmatprep.subr.mxu0 0.0
        %1390 = vmatpush1.xpose.msra.mxu0 0.0
        %1391 = vmatprep.subr.mxu0 0.0
        %1392 = vmatpush1.xpose.msra.mxu0 0.0
        %1393 = vmatprep.subr.mxu0 0.0
        %1394 = vmatpush1.xpose.msra.mxu0 0.0
        %1395 = vmatprep.subr.mxu0 0.0
        %1396 = vmatpush1.xpose.msra.mxu0 0.0
        %1397 = vmatprep.subr.mxu0 0.0
        %1398 = vmatpush1.xpose.msra.mxu0 0.0
        %1399 = vmatprep.subr.mxu0 0.0
        %1400 = vmatpush1.xpose.msra.mxu0 0.0
        %1401 = vmatprep.subr.mxu0 0.0
        %1402 = vmatpush1.xpose.msra.mxu0 0.0
        %1403 = vmatprep.subr.mxu0 0.0
        %1404 = vmatpush1.xpose.msra.mxu0 0.0
        %1405 = vmatprep.subr.mxu0 0.0
        %1406 = vmatpush1.xpose.msra.mxu0 0.0
        %1407 = vmatprep.subr.mxu0 0.0
        %1408 = vmatpush1.xpose.msra.mxu0 0.0
        %1409 = vmatprep.subr.mxu0 0.0
        %1410 = vmatpush1.xpose.msra.mxu0 0.0
        %1411 = vmatprep.subr.mxu0 0.0
        %1412 = vmatpush1.xpose.msra.mxu0 0.0
        %1413 = vmatprep.subr.mxu0 0.0
        %1414 = vmatpush1.xpose.msra.mxu0 0.0
        %1415 = vmatprep.mubr.f32.mxu0 0.0
        %1416 = vmatmul.mubr.f32.gmra.mrb[0].mxu0 %v1347
        %v1417 = vpop.f32.mrb[0].mxu0
        %v1418 = vadd.f32 0.0, %v1417
        %v1419 = vpop.f32.mrb[0].mxu0
        %1420 = vdwg.mxu0
        %v1421 = vsel %vm702, -1e+09, %v1418
        %v1422 = vsel %vm621, %v1421, -inf
        %1423 = vmax.xlane.f32.xlu0 %v1422
        %v1424 = vpop.xlane.xlu0 %1423
        %v1425 = vsub.f32 %v1421, %v1424
        %v1426 = vmul.f32 %v1425, 1.442695
        %v1427 = vpow.pop %v1426
        %v1428 = vsel %vm621, %v1427, 0.0
        %1429 = vadd.xlane.f32.xlu0 %v1428
        %v1430 = vpop.xlane.xlu0 %1429
        %v1431 = vrcp.pop %v1430
        %v1432 = vmul.f32 %v1427, %v1431
        %1433 = vrot.lane.b32.xlu0 %v611, 40
        %v1434 = vpop.permute.xlu0 %1433
        %v1437 = vsel %vm621, %v1432, 0
        %1439 = vmatprep.subr.mxu0 0.0
        %1440 = vmatpush1.msra.mxu0 %v1434
        %1441 = vmatprep.subr.mxu0 0.0
        %1442 = vmatpush1.msra.mxu0 0.0
        %1443 = vmatprep.subr.mxu0 0.0
        %1444 = vmatpush1.msra.mxu0 0.0
        %1445 = vmatprep.subr.mxu0 0.0
        %1446 = vmatpush1.msra.mxu0 0.0
        %1447 = vmatprep.subr.mxu0 0.0
        %1448 = vmatpush1.msra.mxu0 0.0
        %1449 = vmatprep.subr.mxu0 0.0
        %1450 = vmatpush1.msra.mxu0 0.0
        %1451 = vmatprep.subr.mxu0 0.0
        %1452 = vmatpush1.msra.mxu0 0.0
        %1453 = vmatprep.subr.mxu0 0.0
        %1454 = vmatpush1.msra.mxu0 0.0
        %1455 = vmatprep.subr.mxu0 0.0
        %1456 = vmatpush1.msra.mxu0 0.0
        %1457 = vmatprep.subr.mxu0 0.0
        %1458 = vmatpush1.msra.mxu0 0.0
        %1459 = vmatprep.subr.mxu0 0.0
        %1460 = vmatpush1.msra.mxu0 0.0
        %1461 = vmatprep.subr.mxu0 0.0
        %1462 = vmatpush1.msra.mxu0 0.0
        %1463 = vmatprep.subr.mxu0 0.0
        %1464 = vmatpush1.msra.mxu0 0.0
        %1465 = vmatprep.subr.mxu0 0.0
        %1466 = vmatpush1.msra.mxu0 0.0
        %1467 = vmatprep.subr.mxu0 0.0
        %1468 = vmatpush1.msra.mxu0 0.0
        %1469 = vmatprep.subr.mxu0 0.0
        %1470 = vmatpush1.msra.mxu0 0.0
        %1471 = vmatprep.subr.mxu0 0.0
        %1472 = vmatpush1.msra.mxu0 0.0
        %1473 = vmatprep.subr.mxu0 0.0
        %1474 = vmatpush1.msra.mxu0 0.0
        %1475 = vmatprep.subr.mxu0 0.0
        %1476 = vmatpush1.msra.mxu0 0.0
        %1477 = vmatprep.subr.mxu0 0.0
        %1478 = vmatpush1.msra.mxu0 0.0
        %1479 = vmatprep.subr.mxu0 0.0
        %1480 = vmatpush1.msra.mxu0 0.0
        %1481 = vmatprep.subr.mxu0 0.0
        %1482 = vmatpush1.msra.mxu0 0.0
        %1483 = vmatprep.subr.mxu0 0.0
        %1484 = vmatpush1.msra.mxu0 0.0
        %1485 = vmatprep.subr.mxu0 0.0
        %1486 = vmatpush1.msra.mxu0 0.0
        %1487 = vmatprep.subr.mxu0 0.0
        %1488 = vmatpush1.msra.mxu0 0.0
        %1489 = vmatprep.subr.mxu0 0.0
        %1490 = vmatpush1.msra.mxu0 0.0
        %1491 = vmatprep.subr.mxu0 0.0
        %1492 = vmatpush1.msra.mxu0 0.0
        %1493 = vmatprep.subr.mxu0 0.0
        %1494 = vmatpush1.msra.mxu0 0.0
        %1495 = vmatprep.subr.mxu0 0.0
        %1496 = vmatpush1.msra.mxu0 0.0
        %1497 = vmatprep.subr.mxu0 0.0
        %1498 = vmatpush1.msra.mxu0 0.0
        %1499 = vmatprep.subr.mxu0 0.0
        %1500 = vmatpush1.msra.mxu0 0.0
        %1501 = vmatprep.subr.mxu0 0.0
        %1502 = vmatpush1.msra.mxu0 0.0
        %1503 = vmatprep.mubr.f32.mxu0 0.0
        %1504 = vmatmul.mubr.f32.gmra.mrb[0].mxu0 %v1437
        %v1505 = vpop.f32.mrb[0].mxu0
        %v1506 = vadd.f32 0.0, %v1505
        %v1507 = vpop.f32.mrb[0].mxu0
        %1508 = vdwg.mxu0
        %v1510 = vsel %vm621, %v1506, 0
        %1512 = vmatprep.subr.mxu0 0.0
        %1513 = vmatpush1.msra.mxu0 %v617
        %1514 = vmatprep.subr.mxu0 0.0
        %1515 = vmatpush1.msra.mxu0 0.0
        %1516 = vmatprep.subr.mxu0 0.0
        %1517 = vmatpush1.msra.mxu0 0.0
        %1518 = vmatprep.subr.mxu0 0.0
        %1519 = vmatpush1.msra.mxu0 0.0
        %1520 = vmatprep.subr.mxu0 0.0
        %1521 = vmatpush1.msra.mxu0 0.0
        %1522 = vmatprep.subr.mxu0 0.0
        %1523 = vmatpush1.msra.mxu0 0.0
        %1524 = vmatprep.subr.mxu0 0.0
        %1525 = vmatpush1.msra.mxu0 0.0
        %1526 = vmatprep.subr.mxu0 0.0
        %1527 = vmatpush1.msra.mxu0 0.0
        %1528 = vmatprep.subr.mxu0 0.0
        %1529 = vmatpush1.msra.mxu0 0.0
        %1530 = vmatprep.subr.mxu0 0.0
        %1531 = vmatpush1.msra.mxu0 0.0
        %1532 = vmatprep.subr.mxu0 0.0
        %1533 = vmatpush1.msra.mxu0 0.0
        %1534 = vmatprep.subr.mxu0 0.0
        %1535 = vmatpush1.msra.mxu0 0.0
        %1536 = vmatprep.subr.mxu0 0.0
        %1537 = vmatpush1.msra.mxu0 0.0
        %1538 = vmatprep.subr.mxu0 0.0
        %1539 = vmatpush1.msra.mxu0 0.0
        %1540 = vmatprep.subr.mxu0 0.0
        %1541 = vmatpush1.msra.mxu0 0.0
        %1542 = vmatprep.subr.mxu0 0.0
        %1543 = vmatpush1.msra.mxu0 0.0
        %1544 = vmatprep.subr.mxu0 0.0
        %1545 = vmatpush1.msra.mxu0 0.0
        %1546 = vmatprep.subr.mxu0 0.0
        %1547 = vmatpush1.msra.mxu0 0.0
        %1548 = vmatprep.subr.mxu0 0.0
        %1549 = vmatpush1.msra.mxu0 0.0
        %1550 = vmatprep.subr.mxu0 0.0
        %1551 = vmatpush1.msra.mxu0 0.0
        %1552 = vmatprep.subr.mxu0 0.0
        %1553 = vmatpush1.msra.mxu0 0.0
        %1554 = vmatprep.subr.mxu0 0.0
        %1555 = vmatpush1.msra.mxu0 0.0
        %1556 = vmatprep.subr.mxu0 0.0
        %1557 = vmatpush1.msra.mxu0 0.0
        %1558 = vmatprep.subr.mxu0 0.0
        %1559 = vmatpush1.msra.mxu0 0.0
        %1560 = vmatprep.subr.mxu0 0.0
        %1561 = vmatpush1.msra.mxu0 0.0
        %1562 = vmatprep.subr.mxu0 0.0
        %1563 = vmatpush1.msra.mxu0 0.0
        %1564 = vmatprep.subr.mxu0 0.0
        %1565 = vmatpush1.msra.mxu0 0.0
        %1566 = vmatprep.subr.mxu0 0.0
        %1567 = vmatpush1.msra.mxu0 0.0
        %1568 = vmatprep.subr.mxu0 0.0
        %1569 = vmatpush1.msra.mxu0 0.0
        %1570 = vmatprep.subr.mxu0 0.0
        %1571 = vmatpush1.msra.mxu0 0.0
        %1572 = vmatprep.subr.mxu0 0.0
        %1573 = vmatpush1.msra.mxu0 0.0
        %1574 = vmatprep.subr.mxu0 0.0
        %1575 = vmatpush1.msra.mxu0 0.0
        %1576 = vmatprep.mubr.f32.mxu0 0.0
        %1577 = vmatmul.mubr.f32.gmra.mrb[0].mxu0 %v1510
        %v1578 = vpop.f32.mrb[0].mxu0
        %v1579 = vadd.f32 0.0, %v1578
        %v1580 = vpop.f32.mrb[0].mxu0
        %1581 = vdwg.mxu0
        %v1582 = vadd.f32 %v1342, %v1579
        %v1583 = vadd.f32 %v497, %v1582
        %v1584 = vld [vmem:[%s5] sm:$0x1]
        %v1586 = vlaneseq
        %v1587 = vshrl.u32 %v1586, 7
        %v1588 = vsub.s32 0, %v1587
        %v1589 = vrot.slane %v1584, %v1588
        %v1591 = vadd.f32 %v1583, %v1589
        %v1592 = vsel %vm499, %v1591, 0.0
        %1593 = vadd.xlane.f32.xlu0 %v1592
        %v1594 = vpop.xlane.xlu0 %1593
        %v1595 = vmul.f32 %v1594, %v503
        %v1596 = vsub.f32 %v1591, %v1595
        %v1597 = vmul.f32 %v1596, %v1596
        %v1598 = vsel %vm499, %v1597, 0.0
        %1599 = vadd.xlane.f32.xlu0 %v1598
        %v1600 = vpop.xlane.xlu0 %1599
        %v1601 = vmul.f32 %v1600, %v503
        %v1602 = vadd.f32 %v1601, 1e-05
        %v1603 = vrsqrt.pop %v1602
        %v1604 = vmul.f32 %v1596, %v1603
        %v1605 = vld [vmem:[%s12] sm:$0x1]
        %v1607 = vlaneseq
        %v1608 = vshrl.u32 %v1607, 7
        %v1609 = vsub.s32 0, %v1608
        %v1610 = vrot.slane %v1605, %v1609
        %v1612 = vmul.f32 %v1604, %v1610
        %v1613 = vld [vmem:[%s13] sm:$0x1]
        %v1615 = vlaneseq
        %v1616 = vshrl.u32 %v1615, 7
        %v1617 = vsub.s32 0, %v1616
        %v1618 = vrot.slane %v1613, %v1617
        %v1620 = vadd.f32 %v1612, %v1618
        %v1621 = vld [vmem:[%s6] sm:$0xff]
        %v1622 = vld [vmem:[%s6 + $0x8] sm:$0xff]
        %v1623 = vld [vmem:[%s6 + $0x10] sm:$0xff]
        %v1624 = vld [vmem:[%s6 + $0x18] sm:$0xff]
        %v1625 = vld [vmem:[%s7] sm:$0x1]
        %v1627 = vlaneseq
        %v1628 = vshrl.u32 %v1627, 7
        %v1629 = vsub.s32 0, %v1628
        %v1630 = vrot.slane %v1625, %v1629
        %v1633 = vsel %vm499, %v1620, 0
        %1635 = vmatprep.subr.mxu0 0.0
        %1636 = vmatpush1.msra.mxu0 %v1621
        %1637 = vmatprep.subr.mxu0 0.0
        %1638 = vmatpush1.msra.mxu0 %v1622
        %1639 = vmatprep.subr.mxu0 0.0
        %1640 = vmatpush1.msra.mxu0 %v1623
        %1641 = vmatprep.subr.mxu0 0.0
        %1642 = vmatpush1.msra.mxu0 %v1624
        %1643 = vmatprep.subr.mxu0 0.0
        %1644 = vmatpush1.msra.mxu0 0.0
        %1645 = vmatprep.subr.mxu0 0.0
        %1646 = vmatpush1.msra.mxu0 0.0
        %1647 = vmatprep.subr.mxu0 0.0
        %1648 = vmatpush1.msra.mxu0 0.0
        %1649 = vmatprep.subr.mxu0 0.0
        %1650 = vmatpush1.msra.mxu0 0.0
        %1651 = vmatprep.subr.mxu0 0.0
        %1652 = vmatpush1.msra.mxu0 0.0
        %1653 = vmatprep.subr.mxu0 0.0
        %1654 = vmatpush1.msra.mxu0 0.0
        %1655 = vmatprep.subr.mxu0 0.0
        %1656 = vmatpush1.msra.mxu0 0.0
        %1657 = vmatprep.subr.mxu0 0.0
        %1658 = vmatpush1.msra.mxu0 0.0
        %1659 = vmatprep.subr.mxu0 0.0
        %1660 = vmatpush1.msra.mxu0 0.0
        %1661 = vmatprep.subr.mxu0 0.0
        %1662 = vmatpush1.msra.mxu0 0.0
        %1663 = vmatprep.subr.mxu0 0.0
        %1664 = vmatpush1.msra.mxu0 0.0
        %1665 = vmatprep.subr.mxu0 0.0
        %1666 = vmatpush1.msra.mxu0 0.0
        %1667 = vmatprep.subr.mxu0 0.0
        %1668 = vmatpush1.msra.mxu0 0.0
        %1669 = vmatprep.subr.mxu0 0.0
        %1670 = vmatpush1.msra.mxu0 0.0
        %1671 = vmatprep.subr.mxu0 0.0
        %1672 = vmatpush1.msra.mxu0 0.0
        %1673 = vmatprep.subr.mxu0 0.0
        %1674 = vmatpush1.msra.mxu0 0.0
        %1675 = vmatprep.subr.mxu0 0.0
        %1676 = vmatpush1.msra.mxu0 0.0
        %1677 = vmatprep.subr.mxu0 0.0
        %1678 = vmatpush1.msra.mxu0 0.0
        %1679 = vmatprep.subr.mxu0 0.0
        %1680 = vmatpush1.msra.mxu0 0.0
        %1681 = vmatprep.subr.mxu0 0.0
        %1682 = vmatpush1.msra.mxu0 0.0
        %1683 = vmatprep.subr.mxu0 0.0
        %1684 = vmatpush1.msra.mxu0 0.0
        %1685 = vmatprep.subr.mxu0 0.0
        %1686 = vmatpush1.msra.mxu0 0.0
        %1687 = vmatprep.subr.mxu0 0.0
        %1688 = vmatpush1.msra.mxu0 0.0
        %1689 = vmatprep.subr.mxu0 0.0
        %1690 = vmatpush1.msra.mxu0 0.0
        %1691 = vmatprep.subr.mxu0 0.0
        %1692 = vmatpush1.msra.mxu0 0.0
        %1693 = vmatprep.subr.mxu0 0.0
        %1694 = vmatpush1.msra.mxu0 0.0
        %1695 = vmatprep.subr.mxu0 0.0
        %1696 = vmatpush1.msra.mxu0 0.0
        %1697 = vmatprep.subr.mxu0 0.0
        %1698 = vmatpush1.msra.mxu0 0.0
        %1699 = vmatprep.mubr.f32.mxu0 0.0
        %1700 = vmatmul.mubr.f32.gmra.mrb[0].mxu0 %v1633
        %v1701 = vpop.f32.mrb[0].mxu0
        %v1702 = vadd.f32 %v1630, %v1701
        %v1703 = vpop.f32.mrb[0].mxu0
        %1704 = vdwg.mxu0
        %v1705 = vmax.f32 %v1702, 0.0
        %v1706 = vld [vmem:[%s8] sm:$0xff]
        %v1707 = vld [vmem:[%s8 + $0x8] sm:$0xff]
        %v1708 = vld [vmem:[%s8 + $0x10] sm:$0xff]
        %v1709 = vld [vmem:[%s8 + $0x18] sm:$0xff]
        %v1710 = vld [vmem:[%s8 + $0x20] sm:$0xff]
        %v1711 = vld [vmem:[%s8 + $0x28] sm:$0xff]
        %v1712 = vld [vmem:[%s8 + $0x30] sm:$0xff]
        %v1713 = vld [vmem:[%s8 + $0x38] sm:$0xff]
        %v1714 = vld [vmem:[%s9] sm:$0x1]
        %v1716 = vlaneseq
        %v1717 = vshrl.u32 %v1716, 7
        %v1718 = vsub.s32 0, %v1717
        %v1719 = vrot.slane %v1714, %v1718
        %vm1721 = vcmask 523264
        %v1723 = vsel %vm1721, %v1705, 0
        %1725 = vmatprep.subr.mxu0 0.0
        %1726 = vmatpush1.msra.mxu0 %v1706
        %1727 = vmatprep.subr.mxu0 0.0
        %1728 = vmatpush1.msra.mxu0 %v1707
        %1729 = vmatprep.subr.mxu0 0.0
        %1730 = vmatpush1.msra.mxu0 %v1708
        %1731 = vmatprep.subr.mxu0 0.0
        %1732 = vmatpush1.msra.mxu0 %v1709
        %1733 = vmatprep.subr.mxu0 0.0
        %1734 = vmatpush1.msra.mxu0 %v1710
        %1735 = vmatprep.subr.mxu0 0.0
        %1736 = vmatpush1.msra.mxu0 %v1711
        %1737 = vmatprep.subr.mxu0 0.0
        %1738 = vmatpush1.msra.mxu0 %v1712
        %1739 = vmatprep.subr.mxu0 0.0
        %1740 = vmatpush1.msra.mxu0 %v1713
        %1741 = vmatprep.subr.mxu0 0.0
        %1742 = vmatpush1.msra.mxu0 0.0
        %1743 = vmatprep.subr.mxu0 0.0
        %1744 = vmatpush1.msra.mxu0 0.0
        %1745 = vmatprep.subr.mxu0 0.0
        %1746 = vmatpush1.msra.mxu0 0.0
        %1747 = vmatprep.subr.mxu0 0.0
        %1748 = vmatpush1.msra.mxu0 0.0
        %1749 = vmatprep.subr.mxu0 0.0
        %1750 = vmatpush1.msra.mxu0 0.0
        %1751 = vmatprep.subr.mxu0 0.0
        %1752 = vmatpush1.msra.mxu0 0.0
        %1753 = vmatprep.subr.mxu0 0.0
        %1754 = vmatpush1.msra.mxu0 0.0
        %1755 = vmatprep.subr.mxu0 0.0
        %1756 = vmatpush1.msra.mxu0 0.0
        %1757 = vmatprep.subr.mxu0 0.0
        %1758 = vmatpush1.msra.mxu0 0.0
        %1759 = vmatprep.subr.mxu0 0.0
        %1760 = vmatpush1.msra.mxu0 0.0
        %1761 = vmatprep.subr.mxu0 0.0
        %1762 = vmatpush1.msra.mxu0 0.0
        %1763 = vmatprep.subr.mxu0 0.0
        %1764 = vmatpush1.msra.mxu0 0.0
        %1765 = vmatprep.subr.mxu0 0.0
        %1766 = vmatpush1.msra.mxu0 0.0
        %1767 = vmatprep.subr.mxu0 0.0
        %1768 = vmatpush1.msra.mxu0 0.0
        %1769 = vmatprep.subr.mxu0 0.0
        %1770 = vmatpush1.msra.mxu0 0.0
        %1771 = vmatprep.subr.mxu0 0.0
        %1772 = vmatpush1.msra.mxu0 0.0
        %1773 = vmatprep.subr.mxu0 0.0
        %1774 = vmatpush1.msra.mxu0 0.0
        %1775 = vmatprep.subr.mxu0 0.0
        %1776 = vmatpush1.msra.mxu0 0.0
        %1777 = vmatprep.subr.mxu0 0.0
        %1778 = vmatpush1.msra.mxu0 0.0
        %1779 = vmatprep.subr.mxu0 0.0
        %1780 = vmatpush1.msra.mxu0 0.0
        %1781 = vmatprep.subr.mxu0 0.0
        %1782 = vmatpush1.msra.mxu0 0.0
        %1783 = vmatprep.subr.mxu0 0.0
        %1784 = vmatpush1.msra.mxu0 0.0
        %1785 = vmatprep.subr.mxu0 0.0
        %1786 = vmatpush1.msra.mxu0 0.0
        %1787 = vmatprep.subr.mxu0 0.0
        %1788 = vmatpush1.msra.mxu0 0.0
        %1789 = vmatprep.mubr.f32.mxu0 0.0
        %1790 = vmatmul.mubr.f32.gmra.mrb[0].mxu0 %v1723
        %v1791 = vpop.f32.mrb[0].mxu0
        %v1792 = vadd.f32 %v1719, %v1791
        %v1793 = vpop.f32.mrb[0].mxu0
        %1794 = vdwg.mxu0
        %v1795 = vadd.f32 %v1591, %v1792
        %1796 = vst.msk [vmem:[%s493] sm:$0xff] %vm499, %v1795
        %s1797 = sand.u32 %s343, 1
        %s1798 = scalar_lea.sflag [#allocation4], %s1797
        %s1799 = sand.u32 %s343, 1
        %s1800 = smul.addr %s1799, 8
        %s1801 = scalar_lea.vmem [#allocation5], %s1800
        // Predicated region
        $region81: #{tpu_custom_call.1} parent=75 // pred_check
          %p1802 = pneg %p353
        $region82: #{tpu_custom_call.1} parent=75 // pred_check_branch
          %1804 = sbr.rel (%p1802) target = $region84
        $region83: #{tpu_custom_call.1} parent=75 // pred_region
          %s1806 = ssub.s32 128, 128
          %1807 = vsyncadd %s1798, %s1806
          %s1808 = smul.addr %s31, 128
          %s1809 = scalar_lea.hbm %s14, %s1808
          %s1811 = sshll.u32 %s1801, 4
          %s1812 = int_to_ptr.vmem [resolvable:$true] %s1811
          %1814 = dma.vmem_to_hbm [thread:$0]  %s1812, 128, %s1809, %s1798
        $region84: #{tpu_custom_call.1} parent=75 // pred_fallthru
          _
      $region76: #{tpu_custom_call.1} parent=5 // pred_fallthru
        _
      %p1815 = scmp.le.s32.totalorder 2, %s26
      // Predicated region
      $region85: #{tpu_custom_call.1} parent=5 // pred_check
        %p1816 = pneg %p1815
      $region86: #{tpu_custom_call.1} parent=5 // pred_check_branch
        %1818 = sbr.rel (%p1816) target = $region88
      $region87: #{tpu_custom_call.1} parent=5 // pred_region
        %s1819 = ssub.s32 %s26, 2
        // Predicated region
        $region89: #{tpu_custom_call.1} parent=87 // pred_check
          %p1820 = pneg %p359
        $region90: #{tpu_custom_call.1} parent=87 // pred_check_branch
          %1822 = sbr.rel (%p1820) target = $region92
        $region91: #{tpu_custom_call.1} parent=87 // pred_region
          %s1823 = sand.u32 %s344, 1
          %s1824 = scalar_lea.sflag [#allocation4], %s1823
          %s1825 = sand.u32 %s344, 1
          %s1826 = smul.addr %s1825, 8
          %s1827 = scalar_lea.vmem [#allocation5], %s1826
          %1828 = dma.done %s1824, 128
        $region92: #{tpu_custom_call.1} parent=87 // pred_fallthru
          _
      $region88: #{tpu_custom_call.1} parent=5 // pred_fallthru
        _
    $region6: #{tpu_custom_call.1} parent=1 // loop_footer
      %s30 = sadd.s32 1, %s26
    $region7: #{tpu_custom_call.1} parent=1 // loop_footer_branch
      %25 = sbr.rel target = $region3
    $region8: #{tpu_custom_call.1} parent=1 // loop_exit
      _
    %1829 = vsyncpa [#allocation3], 1
    %s1830 = scalar_lea.sflag [#allocation3], 1
    %1831 = vsyncpa %s1830, 1
    %1832 = vsyncpa [#allocation4], 1
    %s1833 = scalar_lea.sflag [#allocation4], 1
    %1834 = vsyncpa %s1833, 1

</llo_original>
